<compile_context>
chip_gen: v5e
topology: v5e:2x2
jax: 0.10.0
libtpu: 0.0.40
codegen_flags: <defaults>
</compile_context>

<pallas_src>
import functools

import jax
import jax.numpy as jnp
from jax import lax
from jax.experimental import pallas as pl
from jax.experimental.pallas import tpu as pltpu

_NEG = -1e30  # finite "masked out" additive bias (avoids inf-inf -> NaN)


def map_attention_kernel(q_ref, x_ref, mask_ref, wkv_ref, wproj_ref, bproj_ref,
                         o_ref, kv_ref, acc_ref, m_ref, l_ref,
                         *, n_heads, block_b, block_n):
    """Grid = (batch blocks [parallel], N tiles [arbitrary, online softmax])."""
    K, C = q_ref.shape[1], q_ref.shape[2]
    H = n_heads
    Dh = C // H
    bf16 = jnp.bfloat16
    neg = jnp.float32(_NEG)
    n_idx = pl.program_id(1)

    # ---- init online-softmax state at the first KV tile -------------------------
    @pl.when(n_idx == 0)
    def _():
        m_ref[...] = jnp.full_like(m_ref, neg)
        l_ref[...] = jnp.zeros_like(l_ref)
        acc_ref[...] = jnp.zeros_like(acc_ref)

    # ---- KV projection for this tile: one big bf16 matmul into a bf16 scratch ---
    # (block_n is always a multiple of 8, so the reshape is layout-free.)
    xf = x_ref[...].reshape(block_b * block_n, C)                      # bf16
    kv_ref[...] = jnp.dot(xf, wkv_ref[...],
                          preferred_element_type=jnp.float32).astype(bf16)

    # ---- online-softmax attention update per (batch-in-block, head) -------------
    for b in range(block_b):
        q_b = q_ref[b]                                                 # (K, C) bf16, scale folded
        k_b = kv_ref[b * block_n:(b + 1) * block_n, :C]                # (block_n, C) bf16
        v_b = kv_ref[b * block_n:(b + 1) * block_n, C:]                # (block_n, C) bf16
        bias_b = jnp.where(mask_ref[b] == 0, neg, jnp.float32(0.0))    # (1, block_n)

        acc_prev = acc_ref[b * K:(b + 1) * K, :]                       # (K, C) f32 dense load
        alpha_cols, acc_cols = [], []
        for h in range(H):
            sl = slice(h * Dh, (h + 1) * Dh)
            r = b * H + h
            # scores (K, block_n): contract last dims directly (no transpose).
            s = lax.dot_general(q_b[:, sl], k_b[:, sl],
                                (((1,), (1,)), ((), ())),
                                preferred_element_type=jnp.float32)
            s = s + bias_b
            m_prev = m_ref[r]                                          # (K, 1)
            m_new = jnp.maximum(m_prev, jnp.max(s, axis=-1, keepdims=True))
            alpha = jnp.exp(m_prev - m_new)                            # (K, 1)
            p = jnp.exp(s - m_new)                                     # (K, block_n) f32
            l_ref[r] = alpha * l_ref[r] + jnp.sum(p, axis=-1, keepdims=True)
            m_ref[r] = m_new
            pv = jnp.dot(p.astype(bf16), v_b[:, sl],
                         preferred_element_type=jnp.float32)           # (K, Dh)
            alpha_cols.append(jnp.broadcast_to(alpha, (K, Dh)))
            acc_cols.append(pv)
        # one lane-dense (K, C) accumulator store per batch element
        acc_ref[b * K:(b + 1) * K, :] = (jnp.concatenate(alpha_cols, axis=-1) * acc_prev
                                         + jnp.concatenate(acc_cols, axis=-1))

    # ---- finalize: normalize heads, concat lane-dense, single output projection --
    @pl.when(n_idx == pl.num_programs(1) - 1)
    def _():
        rows = []
        for b in range(block_b):
            acc_b = acc_ref[b * K:(b + 1) * K, :]                      # (K, C) f32
            cols = []
            for h in range(H):
                r = b * H + h
                inv = pl.reciprocal(l_ref[r], approx=True)             # (K, 1) — EUP slot
                cols.append((acc_b[:, h * Dh:(h + 1) * Dh] * inv).astype(bf16))
            rows.append(jnp.concatenate(cols, axis=-1))                # (K, C) bf16
        vals = jnp.concatenate(rows, axis=0)                           # (block_b*K, C) bf16
        out = jnp.dot(vals, wproj_ref[...],
                      preferred_element_type=jnp.float32) + bproj_ref[...]
        o_ref[...] = out.reshape(block_b, K, C).astype(o_ref.dtype)


def _round_up(x, m):
    return ((x + m - 1) // m) * m


def _vmem_limit_bytes():
    """Generation-aware VMEM request: ~75% of physical (48 MiB v7x, 96 MiB v5e/v6e)."""
    try:
        cap = getattr(pltpu.get_tpu_info(), "vmem_capacity_bytes", None)
        if cap:
            return int(cap) * 3 // 4
    except Exception:
        pass
    return 48 * 1024 * 1024  # safe on every generation


def _pick_block_b(B, K, C, block_n, out_itemsize, vmem_limit):
    """Largest divisor of B that fits the VMEM budget, keeps grid[0] >= 2 for megacore
    sharding when B >= 2, and caps at 16 batch elements per grid step."""
    per_b = (4 * block_n * C                       # x tile, bf16, double-buffered
             + 4 * block_n * C                     # kv scratch, bf16 (2C wide)
             + K * C * (4 + 4 + 2 * out_itemsize)  # q (bf16 x2) + acc (f32) + out (x2)
             + 2 * 16 * 128 * 4 * 2)               # m/l padding slack per head-ish
    weights = 6 * C * C + 4 * C                    # bf16 Wkv + Wproj, f32 bias
    budget = max(int(vmem_limit * 0.6) - 2 * weights, per_b)
    cap = max(1, min(budget // per_b, 16))
    if B >= 2:
        cap = min(cap, B // 2)                     # >= 2 grid steps -> both v7x TCs busy
    bb = max(1, min(B, cap))
    while B % bb:
        bb -= 1
    return bb


def map_attention(seed, x, attention_mask, params, n_heads, *, block_b=None, block_n=None):
    """Pallas MAPAttention forward.

    seed: (B, K, C), x: (B, N, C), attention_mask: (B, N) or None (1 = keep, 0 = mask).
    params: (wq (C,C), wkv (C,2C), wproj (C,C), bproj (C,)) stored as (in, out), i.e.
    y = x @ W matches PyTorch's x @ weight.T.
    """
    B, K, C = seed.shape
    Bx, N, Cx = x.shape
    assert B == Bx and C == Cx
    assert C % n_heads == 0
    scale = float((C // n_heads) ** (-0.5))
    wq, wkv, wproj, bproj = params
    bf16 = jnp.bfloat16

    # N tiling for the flash-style online softmax (block_n always a multiple of 8,
    # and either == padded N or a multiple of 128).
    if block_n is None:
        block_n = min(_round_up(N, 8), 512)
    n_pad = _round_up(N, block_n)

    if attention_mask is None:
        attention_mask = jnp.ones((B, N), dtype=jnp.float32)
    mask = attention_mask.astype(jnp.float32)
    x_in = x.astype(bf16)
    if n_pad != N:  # zero-pad keys; padded columns are masked out via the mask
        x_in = jnp.pad(x_in, ((0, 0), (0, n_pad - N), (0, 0)))
        mask = jnp.pad(mask, ((0, 0), (0, n_pad - N)))
    mask = mask.reshape(B, 1, n_pad)

    vmem_limit = _vmem_limit_bytes()
    out_itemsize = jnp.dtype(seed.dtype).itemsize
    if block_b is None:
        block_b = _pick_block_b(B, K, C, block_n, out_itemsize, vmem_limit)
    assert B % block_b == 0
    grid = (B // block_b, n_pad // block_n)

    # q projection once, outside the kernel, as one bf16 MXU matmul; softmax scale
    # folded into q; handed to the kernel in bf16 (halves the q DMA).
    q = (jnp.einsum('bkc,cd->bkd', seed.astype(bf16), wq.astype(bf16),
                    preferred_element_type=jnp.float32) * scale).astype(bf16)
    wkv_bf16 = wkv.astype(bf16)
    wproj_bf16 = wproj.astype(bf16)
    bproj2 = bproj.reshape(1, C).astype(jnp.float32)

    kernel = functools.partial(map_attention_kernel, n_heads=n_heads,
                               block_b=block_b, block_n=block_n)

    flops = (4 * B * n_pad * C * C        # kv projection
             + 4 * B * K * n_pad * C      # scores + attn @ V
             + 2 * B * K * C * C)         # output projection
    cost = pl.CostEstimate(
        flops=int(flops),
        transcendentals=int(B * n_heads * K * (n_pad + 2)),
        bytes_accessed=int(x_in.size * 2 + q.size * 2 + mask.size * 4
                           + (wkv.size + wproj.size) * 2 + bproj.size * 4
                           + B * K * C * out_itemsize))

    def build(single_buffer_weights):
        def const_spec(shape):
            idx = lambda b, n: (0,) * len(shape)
            if single_buffer_weights:
                # grid-invariant weights: no double buffering (saves VMEM + redundant DMA)
                return pl.BlockSpec(shape, idx, pipeline_mode=pl.Buffered(1))
            return pl.BlockSpec(shape, idx)

        return pl.pallas_call(
            kernel,
            out_shape=jax.ShapeDtypeStruct((B, K, C), seed.dtype),
            grid_spec=pltpu.PrefetchScalarGridSpec(
                num_scalar_prefetch=0,
                grid=grid,
                in_specs=[
                    pl.BlockSpec((block_b, K, C), lambda b, n: (b, 0, 0)),        # q (bf16)
                    pl.BlockSpec((block_b, block_n, C), lambda b, n: (b, n, 0)),  # x (bf16)
                    pl.BlockSpec((block_b, 1, block_n), lambda b, n: (b, 0, n)),  # mask (f32)
                    const_spec((C, 2 * C)),                                       # Wkv (bf16)
                    const_spec((C, C)),                                           # Wproj (bf16)
                    const_spec((1, C)),                                           # bias (f32)
                ],
                out_specs=pl.BlockSpec((block_b, K, C), lambda b, n: (b, 0, 0)),
                scratch_shapes=[
                    pltpu.VMEM((block_b * block_n, 2 * C), bf16),          # KV tile (bf16)
                    pltpu.VMEM((block_b * K, C), jnp.float32),             # attention acc
                    pltpu.VMEM((block_b * n_heads, K, 1), jnp.float32),    # running max
                    pltpu.VMEM((block_b * n_heads, K, 1), jnp.float32),    # running denom
                ]),
            compiler_params=pltpu.CompilerParams(
                dimension_semantics=("parallel", "arbitrary"),
                vmem_limit_bytes=vmem_limit),
            cost_estimate=cost,
        )

    args = (q, x_in, mask, wkv_bf16, wproj_bf16, bproj2)
    try:
        return jax.block_until_ready(build(True)(*args))
    except Exception:
        # pipeline_mode=pl.Buffered(1) unavailable on this jax build -> default buffering.
        return build(False)(*args)


def init_params(key, embed_dim):
    """Deterministic init mimicking nn.Linear default (uniform(-1/sqrt(in), 1/sqrt(in)))."""
    kq, kkv, kp, kb = jax.random.split(key, 4)
    bound = 1.0 / (embed_dim ** 0.5)
    wq = jax.random.uniform(kq, (embed_dim, embed_dim), jnp.float32, -bound, bound)
    wkv = jax.random.uniform(kkv, (embed_dim, 2 * embed_dim), jnp.float32, -bound, bound)
    wproj = jax.random.uniform(kp, (embed_dim, embed_dim), jnp.float32, -bound, bound)
    bproj = jax.random.uniform(kb, (embed_dim,), jnp.float32, -bound, bound)
    return wq, wkv, wproj, bproj


def map_attention_reference(seed, x, attention_mask, params, n_heads):
    """Pure-JAX f32 reference mirroring the PyTorch forward, for verification."""
    wq, wkv, wproj, bproj = params
    B, K, C = seed.shape
    _, N, _ = x.shape
    H = n_heads
    Dh = C // H
    scale = Dh ** (-0.5)
    q = (seed @ wq).reshape(B, K, H, Dh).transpose(0, 2, 1, 3)            # (B,H,K,Dh)
    kv = (x @ wkv).reshape(B, N, 2, H, Dh).transpose(2, 0, 3, 1, 4)       # (2,B,H,N,Dh)
    k, v = kv[0], kv[1]
    scores = q @ (jnp.swapaxes(k, -2, -1) * scale)                        # (B,H,K,N)
    if attention_mask is not None:
        m = attention_mask[:, None, None, :]
        scores = jnp.where(m == 0, -jnp.inf, scores)
    attn = jax.nn.softmax(scores, axis=-1)
    vals = (attn @ v).transpose(0, 2, 1, 3).reshape(B, K, C)
    return vals @ wproj + bproj


if __name__ == "__main__":
    key = jax.random.PRNGKey(0)
    B, K, N, C, n_heads = 2, 4, 16, 32, 4

    k_seed, k_x, k_mask, k_params = jax.random.split(key, 4)
    seed = jax.random.normal(k_seed, (B, K, C), jnp.float32)
    x = jax.random.normal(k_x, (B, N, C), jnp.float32)
    # Mask with some zeros (but never a fully-masked row; -1e30 bias vs -inf caveat).
    attention_mask = (jax.random.uniform(k_mask, (B, N)) > 0.3).astype(jnp.float32)
    attention_mask = attention_mask.at[:, 0].set(1.0)

    params = init_params(k_params, C)

    out = jax.block_until_ready(map_attention(seed, x, attention_mask, params, n_heads))
    ref = map_attention_reference(seed, x, attention_mask, params, n_heads)

    assert out.shape == (B, K, C)
    # bf16 MXU operands (q/k/v/p/weights) + approx reciprocal -> compare against the f32
    # reference with a correspondingly loosened tolerance.
    assert jnp.allclose(out, ref, atol=3e-2, rtol=3e-2), "mismatch vs reference"

    print("KERNEL_OK")
</pallas_src>

<mosaic_0001>
module attributes {stable_mosaic.version = 11 : i64} {
  func.func @map_attention_kernel(%arg0: i32, %arg1: i32, %arg2: memref<1x4x32xbf16, #tpu.memory_space<vmem>>, %arg3: memref<1x16x32xbf16, #tpu.memory_space<vmem>>, %arg4: memref<1x1x16xf32, #tpu.memory_space<vmem>>, %arg5: memref<32x64xbf16, #tpu.memory_space<vmem>>, %arg6: memref<32x32xbf16, #tpu.memory_space<vmem>>, %arg7: memref<1x32xf32, #tpu.memory_space<vmem>>, %arg8: memref<1x4x32xf32, #tpu.memory_space<vmem>>, %arg9: memref<16x64xbf16, #tpu.memory_space<vmem>>, %arg10: memref<4x32xf32, #tpu.memory_space<vmem>>, %arg11: memref<4x4x1xf32, #tpu.memory_space<vmem>>, %arg12: memref<4x4x1xf32, #tpu.memory_space<vmem>>) attributes {dimension_semantics = [#tpu.dimension_semantics<parallel>, #tpu.dimension_semantics<arbitrary>], iteration_bounds = array<i64: 2, 1>, scalar_prefetch = 0 : i64, scratch_operands = 4 : i64, tpu.core_type = #tpu.core_type<tc>, window_params = [{transform_indices = @transform_0, window_bounds = array<i64: 1, 4, 32>}, {transform_indices = @transform_1, window_bounds = array<i64: 1, 16, 32>}, {transform_indices = @transform_2, window_bounds = array<i64: 1, 1, 16>}, {pipeline_mode = #tpu.pipeline_mode<synchronous>, transform_indices = @transform_3, window_bounds = array<i64: 32, 64>}, {pipeline_mode = #tpu.pipeline_mode<synchronous>, transform_indices = @transform_4, window_bounds = array<i64: 32, 32>}, {pipeline_mode = #tpu.pipeline_mode<synchronous>, transform_indices = @transform_5, window_bounds = array<i64: 1, 32>}, {transform_indices = @transform_6, window_bounds = array<i64: 1, 4, 32>}]} {
    %c0_i32 = arith.constant 0 : i32
    %0 = arith.cmpi eq, %arg1, %c0_i32 : i32
    %1 = arith.extui %0 : i1 to i32
    %cst = arith.constant -1.000000e+30 : f32
    %c0_i32_0 = arith.constant 0 : i32
    %2 = arith.cmpi ne, %1, %c0_i32_0 : i32
    scf.if %2 {
      %157 = vector.broadcast %cst : f32 to vector<4x4x1xf32>
      %c0_87 = arith.constant 0 : index
      %c0_88 = arith.constant 0 : index
      %c0_89 = arith.constant 0 : index
      %158 = vector.load %arg11[%c0_87, %c0_88, %c0_89] : memref<4x4x1xf32, #tpu.memory_space<vmem>>, vector<4x4x1xf32>
      tpu.vector_store %arg11[%c0_87, %c0_88, %c0_89], %157 {strides = array<i32>} : memref<4x4x1xf32, #tpu.memory_space<vmem>>, vector<4x4x1xf32>,
      %cst_90 = arith.constant 0.000000e+00 : f32
      %159 = vector.broadcast %cst_90 : f32 to vector<4x4x1xf32>
      %c0_91 = arith.constant 0 : index
      %c0_92 = arith.constant 0 : index
      %c0_93 = arith.constant 0 : index
      %160 = vector.load %arg12[%c0_91, %c0_92, %c0_93] : memref<4x4x1xf32, #tpu.memory_space<vmem>>, vector<4x4x1xf32>
      tpu.vector_store %arg12[%c0_91, %c0_92, %c0_93], %159 {strides = array<i32>} : memref<4x4x1xf32, #tpu.memory_space<vmem>>, vector<4x4x1xf32>,
      %cst_94 = arith.constant 0.000000e+00 : f32
      %161 = vector.broadcast %cst_94 : f32 to vector<4x32xf32>
      %c0_95 = arith.constant 0 : index
      %c0_96 = arith.constant 0 : index
      %162 = vector.load %arg10[%c0_95, %c0_96] : memref<4x32xf32, #tpu.memory_space<vmem>>, vector<4x32xf32>
      tpu.vector_store %arg10[%c0_95, %c0_96], %161 {strides = array<i32>} : memref<4x32xf32, #tpu.memory_space<vmem>>, vector<4x32xf32>,
    } else {
    }
    %c0 = arith.constant 0 : index
    %c0_1 = arith.constant 0 : index
    %c0_2 = arith.constant 0 : index
    %3 = vector.load %arg3[%c0, %c0_1, %c0_2] : memref<1x16x32xbf16, #tpu.memory_space<vmem>>, vector<1x16x32xbf16>
    %4 = vector.shape_cast %3 : vector<1x16x32xbf16> to vector<16x32xbf16>
    %c0_3 = arith.constant 0 : index
    %c0_4 = arith.constant 0 : index
    %5 = vector.load %arg5[%c0_3, %c0_4] : memref<32x64xbf16, #tpu.memory_space<vmem>>, vector<32x64xbf16>
    %cst_5 = arith.constant dense<0.000000e+00> : vector<16x64xf32>
    %6 = tpu.matmul %4, %5, %cst_5 {dimension_numbers = #tpu.dot_dimension_numbers<[1], [0], [0], [1], [0, 0, 1, 1], [], []>} : vector<16x32xbf16>, vector<32x64xbf16>, vector<16x64xf32> -> vector<16x64xf32>
    %7 = arith.truncf %6 : vector<16x64xf32> to vector<16x64xbf16>
    %c0_6 = arith.constant 0 : index
    %c0_7 = arith.constant 0 : index
    %8 = vector.load %arg9[%c0_6, %c0_7] : memref<16x64xbf16, #tpu.memory_space<vmem>>, vector<16x64xbf16>
    tpu.vector_store %arg9[%c0_6, %c0_7], %7 {strides = array<i32>} : memref<16x64xbf16, #tpu.memory_space<vmem>>, vector<16x64xbf16>,
    %c0_8 = arith.constant 0 : index
    %c0_9 = arith.constant 0 : index
    %c0_10 = arith.constant 0 : index
    %9 = vector.load %arg2[%c0_8, %c0_9, %c0_10] : memref<1x4x32xbf16, #tpu.memory_space<vmem>>, vector<1x4x32xbf16>
    %10 = vector.shape_cast %9 : vector<1x4x32xbf16> to vector<4x32xbf16>
    %c0_11 = arith.constant 0 : index
    %c0_12 = arith.constant 0 : index
    %11 = vector.load %arg9[%c0_11, %c0_12] : memref<16x64xbf16, #tpu.memory_space<vmem>>, vector<16x32xbf16>
    %c0_13 = arith.constant 0 : index
    %c32 = arith.constant 32 : index
    %12 = vector.load %arg9[%c0_13, %c32] : memref<16x64xbf16, #tpu.memory_space<vmem>>, vector<16x32xbf16>
    %c0_14 = arith.constant 0 : index
    %c0_15 = arith.constant 0 : index
    %c0_16 = arith.constant 0 : index
    %13 = vector.load %arg4[%c0_14, %c0_15, %c0_16] : memref<1x1x16xf32, #tpu.memory_space<vmem>>, vector<1x1x16xf32>
    %14 = vector.shape_cast %13 : vector<1x1x16xf32> to vector<1x16xf32>
    %cst_17 = arith.constant 0.000000e+00 : f32
    %15 = vector.broadcast %cst_17 : f32 to vector<1x16xf32>
    %16 = arith.cmpf oeq, %14, %15 : vector<1x16xf32>
    %cst_18 = arith.constant -1.000000e+30 : f32
    %cst_19 = arith.constant 0.000000e+00 : f32
    %17 = vector.broadcast %cst_18 : f32 to vector<1x16xf32>
    %18 = vector.broadcast %cst_19 : f32 to vector<1x16xf32>
    %19 = arith.select %16, %17, %18 : vector<1x16xi1>, vector<1x16xf32>
    %c0_20 = arith.constant 0 : index
    %c0_21 = arith.constant 0 : index
    %20 = vector.load %arg10[%c0_20, %c0_21] : memref<4x32xf32, #tpu.memory_space<vmem>>, vector<4x32xf32>
    %21 = vector.extract_strided_slice %10 {offsets = [0, 0], sizes = [4, 8], strides = [1, 1]} : vector<4x32xbf16> to vector<4x8xbf16>
    %22 = vector.extract_strided_slice %11 {offsets = [0, 0], sizes = [16, 8], strides = [1, 1]} : vector<16x32xbf16> to vector<16x8xbf16>
    %cst_22 = arith.constant dense<0.000000e+00> : vector<4x16xf32>
    %23 = tpu.matmul %21, %22, %cst_22 {dimension_numbers = #tpu.dot_dimension_numbers<[1], [1], [0], [0], [0, 0, 1, 0], [], []>} : vector<4x8xbf16>, vector<16x8xbf16>, vector<4x16xf32> -> vector<4x16xf32>
    %24 = vector.broadcast %19 : vector<1x16xf32> to vector<4x16xf32>
    %25 = arith.addf %23, %24 : vector<4x16xf32>
    %c0_23 = arith.constant 0 : index
    %c0_24 = arith.constant 0 : index
    %c0_25 = arith.constant 0 : index
    %26 = vector.load %arg11[%c0_23, %c0_24, %c0_25] : memref<4x4x1xf32, #tpu.memory_space<vmem>>, vector<1x4x1xf32>
    %27 = vector.shape_cast %26 : vector<1x4x1xf32> to vector<4x1xf32>
    %cst_26 = arith.constant dense<0xFF800000> : vector<4xf32>
    %28 = vector.multi_reduction <maximumf>, %25, %cst_26 [1] : vector<4x16xf32> to vector<4xf32>
    %29 = vector.shape_cast %28 : vector<4xf32> to vector<4x1xf32>
    %30 = arith.maximumf %27, %29 : vector<4x1xf32>
    %31 = arith.subf %27, %30 : vector<4x1xf32>
    %32 = math.exp %31 : vector<4x1xf32>
    %33 = vector.broadcast %30 : vector<4x1xf32> to vector<4x16xf32>
    %34 = arith.subf %25, %33 : vector<4x16xf32>
    %35 = math.exp %34 : vector<4x16xf32>
    %c0_27 = arith.constant 0 : index
    %c0_28 = arith.constant 0 : index
    %c0_29 = arith.constant 0 : index
    %36 = vector.load %arg12[%c0_27, %c0_28, %c0_29] : memref<4x4x1xf32, #tpu.memory_space<vmem>>, vector<1x4x1xf32>
    %37 = vector.shape_cast %36 : vector<1x4x1xf32> to vector<4x1xf32>
    %38 = arith.mulf %32, %37 : vector<4x1xf32>
    %cst_30 = arith.constant dense<0.000000e+00> : vector<4xf32>
    %39 = vector.multi_reduction <add>, %35, %cst_30 [1] : vector<4x16xf32> to vector<4xf32>
    %40 = vector.shape_cast %39 : vector<4xf32> to vector<4x1xf32>
    %41 = arith.addf %38, %40 : vector<4x1xf32>
    %c0_31 = arith.constant 0 : index
    %c0_32 = arith.constant 0 : index
    %c0_33 = arith.constant 0 : index
    %42 = vector.load %arg12[%c0_31, %c0_32, %c0_33] : memref<4x4x1xf32, #tpu.memory_space<vmem>>, vector<1x4x1xf32>
    %43 = vector.shape_cast %42 : vector<1x4x1xf32> to vector<4x1xf32>
    %44 = vector.shape_cast %41 : vector<4x1xf32> to vector<1x4x1xf32>
    tpu.vector_store %arg12[%c0_31, %c0_32, %c0_33], %44 {strides = array<i32>} : memref<4x4x1xf32, #tpu.memory_space<vmem>>, vector<1x4x1xf32>,
    %c0_34 = arith.constant 0 : index
    %c0_35 = arith.constant 0 : index
    %c0_36 = arith.constant 0 : index
    %45 = vector.load %arg11[%c0_34, %c0_35, %c0_36] : memref<4x4x1xf32, #tpu.memory_space<vmem>>, vector<1x4x1xf32>
    %46 = vector.shape_cast %45 : vector<1x4x1xf32> to vector<4x1xf32>
    %47 = vector.shape_cast %30 : vector<4x1xf32> to vector<1x4x1xf32>
    tpu.vector_store %arg11[%c0_34, %c0_35, %c0_36], %47 {strides = array<i32>} : memref<4x4x1xf32, #tpu.memory_space<vmem>>, vector<1x4x1xf32>,
    %48 = arith.truncf %35 : vector<4x16xf32> to vector<4x16xbf16>
    %49 = vector.extract_strided_slice %12 {offsets = [0, 0], sizes = [16, 8], strides = [1, 1]} : vector<16x32xbf16> to vector<16x8xbf16>
    %cst_37 = arith.constant dense<0.000000e+00> : vector<4x8xf32>
    %50 = tpu.matmul %48, %49, %cst_37 {dimension_numbers = #tpu.dot_dimension_numbers<[1], [0], [0], [1], [0, 0, 1, 1], [], []>} : vector<4x16xbf16>, vector<16x8xbf16>, vector<4x8xf32> -> vector<4x8xf32>
    %51 = vector.shape_cast %32 : vector<4x1xf32> to vector<4x1xf32>
    %52 = vector.broadcast %51 : vector<4x1xf32> to vector<4x8xf32>
    %53 = vector.extract_strided_slice %10 {offsets = [0, 8], sizes = [4, 8], strides = [1, 1]} : vector<4x32xbf16> to vector<4x8xbf16>
    %54 = vector.extract_strided_slice %11 {offsets = [0, 8], sizes = [16, 8], strides = [1, 1]} : vector<16x32xbf16> to vector<16x8xbf16>
    %cst_38 = arith.constant dense<0.000000e+00> : vector<4x16xf32>
    %55 = tpu.matmul %53, %54, %cst_38 {dimension_numbers = #tpu.dot_dimension_numbers<[1], [1], [0], [0], [0, 0, 1, 0], [], []>} : vector<4x8xbf16>, vector<16x8xbf16>, vector<4x16xf32> -> vector<4x16xf32>
    %56 = vector.broadcast %19 : vector<1x16xf32> to vector<4x16xf32>
    %57 = arith.addf %55, %56 : vector<4x16xf32>
    %c1 = arith.constant 1 : index
    %c0_39 = arith.constant 0 : index
    %c0_40 = arith.constant 0 : index
    %58 = vector.load %arg11[%c1, %c0_39, %c0_40] : memref<4x4x1xf32, #tpu.memory_space<vmem>>, vector<1x4x1xf32>
    %59 = vector.shape_cast %58 : vector<1x4x1xf32> to vector<4x1xf32>
    %cst_41 = arith.constant dense<0xFF800000> : vector<4xf32>
    %60 = vector.multi_reduction <maximumf>, %57, %cst_41 [1] : vector<4x16xf32> to vector<4xf32>
    %61 = vector.shape_cast %60 : vector<4xf32> to vector<4x1xf32>
    %62 = arith.maximumf %59, %61 : vector<4x1xf32>
    %63 = arith.subf %59, %62 : vector<4x1xf32>
    %64 = math.exp %63 : vector<4x1xf32>
    %65 = vector.broadcast %62 : vector<4x1xf32> to vector<4x16xf32>
    %66 = arith.subf %57, %65 : vector<4x16xf32>
    %67 = math.exp %66 : vector<4x16xf32>
    %c1_42 = arith.constant 1 : index
    %c0_43 = arith.constant 0 : index
    %c0_44 = arith.constant 0 : index
    %68 = vector.load %arg12[%c1_42, %c0_43, %c0_44] : memref<4x4x1xf32, #tpu.memory_space<vmem>>, vector<1x4x1xf32>
    %69 = vector.shape_cast %68 : vector<1x4x1xf32> to vector<4x1xf32>
    %70 = arith.mulf %64, %69 : vector<4x1xf32>
    %cst_45 = arith.constant dense<0.000000e+00> : vector<4xf32>
    %71 = vector.multi_reduction <add>, %67, %cst_45 [1] : vector<4x16xf32> to vector<4xf32>
    %72 = vector.shape_cast %71 : vector<4xf32> to vector<4x1xf32>
    %73 = arith.addf %70, %72 : vector<4x1xf32>
    %c1_46 = arith.constant 1 : index
    %c0_47 = arith.constant 0 : index
    %c0_48 = arith.constant 0 : index
    %74 = vector.load %arg12[%c1_46, %c0_47, %c0_48] : memref<4x4x1xf32, #tpu.memory_space<vmem>>, vector<1x4x1xf32>
    %75 = vector.shape_cast %74 : vector<1x4x1xf32> to vector<4x1xf32>
    %76 = vector.shape_cast %73 : vector<4x1xf32> to vector<1x4x1xf32>
    tpu.vector_store %arg12[%c1_46, %c0_47, %c0_48], %76 {strides = array<i32>} : memref<4x4x1xf32, #tpu.memory_space<vmem>>, vector<1x4x1xf32>,
    %c1_49 = arith.constant 1 : index
    %c0_50 = arith.constant 0 : index
    %c0_51 = arith.constant 0 : index
    %77 = vector.load %arg11[%c1_49, %c0_50, %c0_51] : memref<4x4x1xf32, #tpu.memory_space<vmem>>, vector<1x4x1xf32>
    %78 = vector.shape_cast %77 : vector<1x4x1xf32> to vector<4x1xf32>
    %79 = vector.shape_cast %62 : vector<4x1xf32> to vector<1x4x1xf32>
    tpu.vector_store %arg11[%c1_49, %c0_50, %c0_51], %79 {strides = array<i32>} : memref<4x4x1xf32, #tpu.memory_space<vmem>>, vector<1x4x1xf32>,
    %80 = arith.truncf %67 : vector<4x16xf32> to vector<4x16xbf16>
    %81 = vector.extract_strided_slice %12 {offsets = [0, 8], sizes = [16, 8], strides = [1, 1]} : vector<16x32xbf16> to vector<16x8xbf16>
    %cst_52 = arith.constant dense<0.000000e+00> : vector<4x8xf32>
    %82 = tpu.matmul %80, %81, %cst_52 {dimension_numbers = #tpu.dot_dimension_numbers<[1], [0], [0], [1], [0, 0, 1, 1], [], []>} : vector<4x16xbf16>, vector<16x8xbf16>, vector<4x8xf32> -> vector<4x8xf32>
    %83 = vector.shape_cast %64 : vector<4x1xf32> to vector<4x1xf32>
    %84 = vector.broadcast %83 : vector<4x1xf32> to vector<4x8xf32>
    %85 = vector.extract_strided_slice %10 {offsets = [0, 16], sizes = [4, 8], strides = [1, 1]} : vector<4x32xbf16> to vector<4x8xbf16>
    %86 = vector.extract_strided_slice %11 {offsets = [0, 16], sizes = [16, 8], strides = [1, 1]} : vector<16x32xbf16> to vector<16x8xbf16>
    %cst_53 = arith.constant dense<0.000000e+00> : vector<4x16xf32>
    %87 = tpu.matmul %85, %86, %cst_53 {dimension_numbers = #tpu.dot_dimension_numbers<[1], [1], [0], [0], [0, 0, 1, 0], [], []>} : vector<4x8xbf16>, vector<16x8xbf16>, vector<4x16xf32> -> vector<4x16xf32>
    %88 = vector.broadcast %19 : vector<1x16xf32> to vector<4x16xf32>
    %89 = arith.addf %87, %88 : vector<4x16xf32>
    %c2 = arith.constant 2 : index
    %c0_54 = arith.constant 0 : index
    %c0_55 = arith.constant 0 : index
    %90 = vector.load %arg11[%c2, %c0_54, %c0_55] : memref<4x4x1xf32, #tpu.memory_space<vmem>>, vector<1x4x1xf32>
    %91 = vector.shape_cast %90 : vector<1x4x1xf32> to vector<4x1xf32>
    %cst_56 = arith.constant dense<0xFF800000> : vector<4xf32>
    %92 = vector.multi_reduction <maximumf>, %89, %cst_56 [1] : vector<4x16xf32> to vector<4xf32>
    %93 = vector.shape_cast %92 : vector<4xf32> to vector<4x1xf32>
    %94 = arith.maximumf %91, %93 : vector<4x1xf32>
    %95 = arith.subf %91, %94 : vector<4x1xf32>
    %96 = math.exp %95 : vector<4x1xf32>
    %97 = vector.broadcast %94 : vector<4x1xf32> to vector<4x16xf32>
    %98 = arith.subf %89, %97 : vector<4x16xf32>
    %99 = math.exp %98 : vector<4x16xf32>
    %c2_57 = arith.constant 2 : index
    %c0_58 = arith.constant 0 : index
    %c0_59 = arith.constant 0 : index
    %100 = vector.load %arg12[%c2_57, %c0_58, %c0_59] : memref<4x4x1xf32, #tpu.memory_space<vmem>>, vector<1x4x1xf32>
    %101 = vector.shape_cast %100 : vector<1x4x1xf32> to vector<4x1xf32>
    %102 = arith.mulf %96, %101 : vector<4x1xf32>
    %cst_60 = arith.constant dense<0.000000e+00> : vector<4xf32>
    %103 = vector.multi_reduction <add>, %99, %cst_60 [1] : vector<4x16xf32> to vector<4xf32>
    %104 = vector.shape_cast %103 : vector<4xf32> to vector<4x1xf32>
    %105 = arith.addf %102, %104 : vector<4x1xf32>
    %c2_61 = arith.constant 2 : index
    %c0_62 = arith.constant 0 : index
    %c0_63 = arith.constant 0 : index
    %106 = vector.load %arg12[%c2_61, %c0_62, %c0_63] : memref<4x4x1xf32, #tpu.memory_space<vmem>>, vector<1x4x1xf32>
    %107 = vector.shape_cast %106 : vector<1x4x1xf32> to vector<4x1xf32>
    %108 = vector.shape_cast %105 : vector<4x1xf32> to vector<1x4x1xf32>
    tpu.vector_store %arg12[%c2_61, %c0_62, %c0_63], %108 {strides = array<i32>} : memref<4x4x1xf32, #tpu.memory_space<vmem>>, vector<1x4x1xf32>,
    %c2_64 = arith.constant 2 : index
    %c0_65 = arith.constant 0 : index
    %c0_66 = arith.constant 0 : index
    %109 = vector.load %arg11[%c2_64, %c0_65, %c0_66] : memref<4x4x1xf32, #tpu.memory_space<vmem>>, vector<1x4x1xf32>
    %110 = vector.shape_cast %109 : vector<1x4x1xf32> to vector<4x1xf32>
    %111 = vector.shape_cast %94 : vector<4x1xf32> to vector<1x4x1xf32>
    tpu.vector_store %arg11[%c2_64, %c0_65, %c0_66], %111 {strides = array<i32>} : memref<4x4x1xf32, #tpu.memory_space<vmem>>, vector<1x4x1xf32>,
    %112 = arith.truncf %99 : vector<4x16xf32> to vector<4x16xbf16>
    %113 = vector.extract_strided_slice %12 {offsets = [0, 16], sizes = [16, 8], strides = [1, 1]} : vector<16x32xbf16> to vector<16x8xbf16>
    %cst_67 = arith.constant dense<0.000000e+00> : vector<4x8xf32>
    %114 = tpu.matmul %112, %113, %cst_67 {dimension_numbers = #tpu.dot_dimension_numbers<[1], [0], [0], [1], [0, 0, 1, 1], [], []>} : vector<4x16xbf16>, vector<16x8xbf16>, vector<4x8xf32> -> vector<4x8xf32>
    %115 = vector.shape_cast %96 : vector<4x1xf32> to vector<4x1xf32>
    %116 = vector.broadcast %115 : vector<4x1xf32> to vector<4x8xf32>
    %117 = vector.extract_strided_slice %10 {offsets = [0, 24], sizes = [4, 8], strides = [1, 1]} : vector<4x32xbf16> to vector<4x8xbf16>
    %118 = vector.extract_strided_slice %11 {offsets = [0, 24], sizes = [16, 8], strides = [1, 1]} : vector<16x32xbf16> to vector<16x8xbf16>
    %cst_68 = arith.constant dense<0.000000e+00> : vector<4x16xf32>
    %119 = tpu.matmul %117, %118, %cst_68 {dimension_numbers = #tpu.dot_dimension_numbers<[1], [1], [0], [0], [0, 0, 1, 0], [], []>} : vector<4x8xbf16>, vector<16x8xbf16>, vector<4x16xf32> -> vector<4x16xf32>
    %120 = vector.broadcast %19 : vector<1x16xf32> to vector<4x16xf32>
    %121 = arith.addf %119, %120 : vector<4x16xf32>
    %c3 = arith.constant 3 : index
    %c0_69 = arith.constant 0 : index
    %c0_70 = arith.constant 0 : index
    %122 = vector.load %arg11[%c3, %c0_69, %c0_70] : memref<4x4x1xf32, #tpu.memory_space<vmem>>, vector<1x4x1xf32>
    %123 = vector.shape_cast %122 : vector<1x4x1xf32> to vector<4x1xf32>
    %cst_71 = arith.constant dense<0xFF800000> : vector<4xf32>
    %124 = vector.multi_reduction <maximumf>, %121, %cst_71 [1] : vector<4x16xf32> to vector<4xf32>
    %125 = vector.shape_cast %124 : vector<4xf32> to vector<4x1xf32>
    %126 = arith.maximumf %123, %125 : vector<4x1xf32>
    %127 = arith.subf %123, %126 : vector<4x1xf32>
    %128 = math.exp %127 : vector<4x1xf32>
    %129 = vector.broadcast %126 : vector<4x1xf32> to vector<4x16xf32>
    %130 = arith.subf %121, %129 : vector<4x16xf32>
    %131 = math.exp %130 : vector<4x16xf32>
    %c3_72 = arith.constant 3 : index
    %c0_73 = arith.constant 0 : index
    %c0_74 = arith.constant 0 : index
    %132 = vector.load %arg12[%c3_72, %c0_73, %c0_74] : memref<4x4x1xf32, #tpu.memory_space<vmem>>, vector<1x4x1xf32>
    %133 = vector.shape_cast %132 : vector<1x4x1xf32> to vector<4x1xf32>
    %134 = arith.mulf %128, %133 : vector<4x1xf32>
    %cst_75 = arith.constant dense<0.000000e+00> : vector<4xf32>
    %135 = vector.multi_reduction <add>, %131, %cst_75 [1] : vector<4x16xf32> to vector<4xf32>
    %136 = vector.shape_cast %135 : vector<4xf32> to vector<4x1xf32>
    %137 = arith.addf %134, %136 : vector<4x1xf32>
    %c3_76 = arith.constant 3 : index
    %c0_77 = arith.constant 0 : index
    %c0_78 = arith.constant 0 : index
    %138 = vector.load %arg12[%c3_76, %c0_77, %c0_78] : memref<4x4x1xf32, #tpu.memory_space<vmem>>, vector<1x4x1xf32>
    %139 = vector.shape_cast %138 : vector<1x4x1xf32> to vector<4x1xf32>
    %140 = vector.shape_cast %137 : vector<4x1xf32> to vector<1x4x1xf32>
    tpu.vector_store %arg12[%c3_76, %c0_77, %c0_78], %140 {strides = array<i32>} : memref<4x4x1xf32, #tpu.memory_space<vmem>>, vector<1x4x1xf32>,
    %c3_79 = arith.constant 3 : index
    %c0_80 = arith.constant 0 : index
    %c0_81 = arith.constant 0 : index
    %141 = vector.load %arg11[%c3_79, %c0_80, %c0_81] : memref<4x4x1xf32, #tpu.memory_space<vmem>>, vector<1x4x1xf32>
    %142 = vector.shape_cast %141 : vector<1x4x1xf32> to vector<4x1xf32>
    %143 = vector.shape_cast %126 : vector<4x1xf32> to vector<1x4x1xf32>
    tpu.vector_store %arg11[%c3_79, %c0_80, %c0_81], %143 {strides = array<i32>} : memref<4x4x1xf32, #tpu.memory_space<vmem>>, vector<1x4x1xf32>,
    %144 = arith.truncf %131 : vector<4x16xf32> to vector<4x16xbf16>
    %145 = vector.extract_strided_slice %12 {offsets = [0, 24], sizes = [16, 8], strides = [1, 1]} : vector<16x32xbf16> to vector<16x8xbf16>
    %cst_82 = arith.constant dense<0.000000e+00> : vector<4x8xf32>
    %146 = tpu.matmul %144, %145, %cst_82 {dimension_numbers = #tpu.dot_dimension_numbers<[1], [0], [0], [1], [0, 0, 1, 1], [], []>} : vector<4x16xbf16>, vector<16x8xbf16>, vector<4x8xf32> -> vector<4x8xf32>
    %147 = vector.shape_cast %128 : vector<4x1xf32> to vector<4x1xf32>
    %148 = vector.broadcast %147 : vector<4x1xf32> to vector<4x8xf32>
    %149 = tpu.concatenate %52, %84, %116, %148 in 1 : vector<4x8xf32>, vector<4x8xf32>, vector<4x8xf32>, vector<4x8xf32> -> vector<4x32xf32>
    %150 = arith.mulf %149, %20 : vector<4x32xf32>
    %151 = tpu.concatenate %50, %82, %114, %146 in 1 : vector<4x8xf32>, vector<4x8xf32>, vector<4x8xf32>, vector<4x8xf32> -> vector<4x32xf32>
    %152 = arith.addf %150, %151 : vector<4x32xf32>
    %c0_83 = arith.constant 0 : index
    %c0_84 = arith.constant 0 : index
    %153 = vector.load %arg10[%c0_83, %c0_84] : memref<4x32xf32, #tpu.memory_space<vmem>>, vector<4x32xf32>
    tpu.vector_store %arg10[%c0_83, %c0_84], %152 {strides = array<i32>} : memref<4x32xf32, #tpu.memory_space<vmem>>, vector<4x32xf32>,
    %c0_i32_85 = arith.constant 0 : i32
    %154 = arith.cmpi eq, %arg1, %c0_i32_85 : i32
    %155 = arith.extui %154 : i1 to i32
    %c0_i32_86 = arith.constant 0 : i32
    %156 = arith.cmpi ne, %155, %c0_i32_86 : i32
    scf.if %156 {
      %c0_87 = arith.constant 0 : index
      %c0_88 = arith.constant 0 : index
      %157 = vector.load %arg10[%c0_87, %c0_88] : memref<4x32xf32, #tpu.memory_space<vmem>>, vector<4x32xf32>
      %c0_89 = arith.constant 0 : index
      %c0_90 = arith.constant 0 : index
      %c0_91 = arith.constant 0 : index
      %158 = vector.load %arg12[%c0_89, %c0_90, %c0_91] : memref<4x4x1xf32, #tpu.memory_space<vmem>>, vector<1x4x1xf32>
      %159 = vector.shape_cast %158 : vector<1x4x1xf32> to vector<4x1xf32>
      %160 = tpu.reciprocal %159 {approx = true} : vector<4x1xf32> -> vector<4x1xf32>
      %161 = vector.extract_strided_slice %157 {offsets = [0, 0], sizes = [4, 8], strides = [1, 1]} : vector<4x32xf32> to vector<4x8xf32>
      %162 = vector.broadcast %160 : vector<4x1xf32> to vector<4x8xf32>
      %163 = arith.mulf %161, %162 : vector<4x8xf32>
      %164 = arith.truncf %163 : vector<4x8xf32> to vector<4x8xbf16>
      %c1_92 = arith.constant 1 : index
      %c0_93 = arith.constant 0 : index
      %c0_94 = arith.constant 0 : index
      %165 = vector.load %arg12[%c1_92, %c0_93, %c0_94] : memref<4x4x1xf32, #tpu.memory_space<vmem>>, vector<1x4x1xf32>
      %166 = vector.shape_cast %165 : vector<1x4x1xf32> to vector<4x1xf32>
      %167 = tpu.reciprocal %166 {approx = true} : vector<4x1xf32> -> vector<4x1xf32>
      %168 = vector.extract_strided_slice %157 {offsets = [0, 8], sizes = [4, 8], strides = [1, 1]} : vector<4x32xf32> to vector<4x8xf32>
      %169 = vector.broadcast %167 : vector<4x1xf32> to vector<4x8xf32>
      %170 = arith.mulf %168, %169 : vector<4x8xf32>
      %171 = arith.truncf %170 : vector<4x8xf32> to vector<4x8xbf16>
      %c2_95 = arith.constant 2 : index
      %c0_96 = arith.constant 0 : index
      %c0_97 = arith.constant 0 : index
      %172 = vector.load %arg12[%c2_95, %c0_96, %c0_97] : memref<4x4x1xf32, #tpu.memory_space<vmem>>, vector<1x4x1xf32>
      %173 = vector.shape_cast %172 : vector<1x4x1xf32> to vector<4x1xf32>
      %174 = tpu.reciprocal %173 {approx = true} : vector<4x1xf32> -> vector<4x1xf32>
      %175 = vector.extract_strided_slice %157 {offsets = [0, 16], sizes = [4, 8], strides = [1, 1]} : vector<4x32xf32> to vector<4x8xf32>
      %176 = vector.broadcast %174 : vector<4x1xf32> to vector<4x8xf32>
      %177 = arith.mulf %175, %176 : vector<4x8xf32>
      %178 = arith.truncf %177 : vector<4x8xf32> to vector<4x8xbf16>
      %c3_98 = arith.constant 3 : index
      %c0_99 = arith.constant 0 : index
      %c0_100 = arith.constant 0 : index
      %179 = vector.load %arg12[%c3_98, %c0_99, %c0_100] : memref<4x4x1xf32, #tpu.memory_space<vmem>>, vector<1x4x1xf32>
      %180 = vector.shape_cast %179 : vector<1x4x1xf32> to vector<4x1xf32>
      %181 = tpu.reciprocal %180 {approx = true} : vector<4x1xf32> -> vector<4x1xf32>
      %182 = vector.extract_strided_slice %157 {offsets = [0, 24], sizes = [4, 8], strides = [1, 1]} : vector<4x32xf32> to vector<4x8xf32>
      %183 = vector.broadcast %181 : vector<4x1xf32> to vector<4x8xf32>
      %184 = arith.mulf %182, %183 : vector<4x8xf32>
      %185 = arith.truncf %184 : vector<4x8xf32> to vector<4x8xbf16>
      %186 = tpu.concatenate %164, %171, %178, %185 in 1 : vector<4x8xbf16>, vector<4x8xbf16>, vector<4x8xbf16>, vector<4x8xbf16> -> vector<4x32xbf16>
      %c0_101 = arith.constant 0 : index
      %c0_102 = arith.constant 0 : index
      %187 = vector.load %arg6[%c0_101, %c0_102] : memref<32x32xbf16, #tpu.memory_space<vmem>>, vector<32x32xbf16>
      %cst_103 = arith.constant dense<0.000000e+00> : vector<4x32xf32>
      %188 = tpu.matmul %186, %187, %cst_103 {dimension_numbers = #tpu.dot_dimension_numbers<[1], [0], [0], [1], [0, 0, 1, 1], [], []>} : vector<4x32xbf16>, vector<32x32xbf16>, vector<4x32xf32> -> vector<4x32xf32>
      %c0_104 = arith.constant 0 : index
      %c0_105 = arith.constant 0 : index
      %189 = vector.load %arg7[%c0_104, %c0_105] : memref<1x32xf32, #tpu.memory_space<vmem>>, vector<1x32xf32>
      %190 = vector.broadcast %189 : vector<1x32xf32> to vector<4x32xf32>
      %191 = arith.addf %188, %190 : vector<4x32xf32>
      %192 = vector.shape_cast %191 : vector<4x32xf32> to vector<1x4x32xf32>
      %c0_106 = arith.constant 0 : index
      %c0_107 = arith.constant 0 : index
      %c0_108 = arith.constant 0 : index
      %193 = vector.load %arg8[%c0_106, %c0_107, %c0_108] : memref<1x4x32xf32, #tpu.memory_space<vmem>>, vector<1x4x32xf32>
      tpu.vector_store %arg8[%c0_106, %c0_107, %c0_108], %192 {strides = array<i32>} : memref<1x4x32xf32, #tpu.memory_space<vmem>>, vector<1x4x32xf32>,
    } else {
    }
    return
  }
  func.func @transform_0(%arg0: i32, %arg1: i32) -> (i32, i32, i32) {
    %c0_i32 = arith.constant 0 : i32
    %c0_i32_0 = arith.constant 0 : i32
    %c0_i32_1 = arith.constant 0 : i32
    return %arg0, %c0_i32, %c0_i32_0 : i32, i32, i32
  }
  func.func @transform_1(%arg0: i32, %arg1: i32) -> (i32, i32, i32) {
    %c0_i32 = arith.constant 0 : i32
    %c0_i32_0 = arith.constant 0 : i32
    return %arg0, %arg1, %c0_i32 : i32, i32, i32
  }
  func.func @transform_2(%arg0: i32, %arg1: i32) -> (i32, i32, i32) {
    %c0_i32 = arith.constant 0 : i32
    %c0_i32_0 = arith.constant 0 : i32
    return %arg0, %c0_i32, %arg1 : i32, i32, i32
  }
  func.func @transform_3(%arg0: i32, %arg1: i32) -> (i32, i32) {
    %c0_i32 = arith.constant 0 : i32
    %c0_i32_0 = arith.constant 0 : i32
    %c0_i32_1 = arith.constant 0 : i32
    return %c0_i32, %c0_i32_0 : i32, i32
  }
  func.func @transform_4(%arg0: i32, %arg1: i32) -> (i32, i32) {
    %c0_i32 = arith.constant 0 : i32
    %c0_i32_0 = arith.constant 0 : i32
    %c0_i32_1 = arith.constant 0 : i32
    return %c0_i32, %c0_i32_0 : i32, i32
  }
  func.func @transform_5(%arg0: i32, %arg1: i32) -> (i32, i32) {
    %c0_i32 = arith.constant 0 : i32
    %c0_i32_0 = arith.constant 0 : i32
    %c0_i32_1 = arith.constant 0 : i32
    return %c0_i32, %c0_i32_0 : i32, i32
  }
  func.func @transform_6(%arg0: i32, %arg1: i32) -> (i32, i32, i32) {
    %c0_i32 = arith.constant 0 : i32
    %c0_i32_0 = arith.constant 0 : i32
    %c0_i32_1 = arith.constant 0 : i32
    return %arg0, %c0_i32, %c0_i32_0 : i32, i32, i32
  }
}

module attributes {stable_mosaic.version = 11 : i64} {
  func.func @map_attention_kernel(%arg0: i32, %arg1: i32, %arg2: memref<1x4x32xbf16, #tpu.memory_space<vmem>>, %arg3: memref<1x16x32xbf16, #tpu.memory_space<vmem>>, %arg4: memref<1x1x16xf32, #tpu.memory_space<vmem>>, %arg5: memref<32x64xbf16, #tpu.memory_space<vmem>>, %arg6: memref<32x32xbf16, #tpu.memory_space<vmem>>, %arg7: memref<1x32xf32, #tpu.memory_space<vmem>>, %arg8: memref<1x4x32xf32, #tpu.memory_space<vmem>>, %arg9: memref<16x64xbf16, #tpu.memory_space<vmem>>, %arg10: memref<4x32xf32, #tpu.memory_space<vmem>>, %arg11: memref<4x4x1xf32, #tpu.memory_space<vmem>>, %arg12: memref<4x4x1xf32, #tpu.memory_space<vmem>>) attributes {dimension_semantics = [#tpu.dimension_semantics<parallel>, #tpu.dimension_semantics<arbitrary>], iteration_bounds = array<i64: 2, 1>, scalar_prefetch = 0 : i64, scratch_operands = 4 : i64, tpu.core_type = #tpu.core_type<tc>, window_params = [{transform_indices = @transform_0, window_bounds = array<i64: 1, 4, 32>}, {transform_indices = @transform_1, window_bounds = array<i64: 1, 16, 32>}, {transform_indices = @transform_2, window_bounds = array<i64: 1, 1, 16>}, {pipeline_mode = #tpu.pipeline_mode<synchronous>, transform_indices = @transform_3, window_bounds = array<i64: 32, 64>}, {pipeline_mode = #tpu.pipeline_mode<synchronous>, transform_indices = @transform_4, window_bounds = array<i64: 32, 32>}, {pipeline_mode = #tpu.pipeline_mode<synchronous>, transform_indices = @transform_5, window_bounds = array<i64: 1, 32>}, {transform_indices = @transform_6, window_bounds = array<i64: 1, 4, 32>}]} {
    %c0_i32 = arith.constant 0 : i32
    %0 = arith.cmpi eq, %arg1, %c0_i32 : i32
    %1 = arith.extui %0 : i1 to i32
    %cst = arith.constant -1.000000e+30 : f32
    %c0_i32_0 = arith.constant 0 : i32
    %2 = arith.cmpi ne, %1, %c0_i32_0 : i32
    scf.if %2 {
      %157 = vector.broadcast %cst : f32 to vector<4x4x1xf32>
      %c0_87 = arith.constant 0 : index
      %c0_88 = arith.constant 0 : index
      %c0_89 = arith.constant 0 : index
      %158 = vector.load %arg11[%c0_87, %c0_88, %c0_89] : memref<4x4x1xf32, #tpu.memory_space<vmem>>, vector<4x4x1xf32>
      tpu.vector_store %arg11[%c0_87, %c0_88, %c0_89], %157 {strides = array<i32>} : memref<4x4x1xf32, #tpu.memory_space<vmem>>, vector<4x4x1xf32>,
      %cst_90 = arith.constant 0.000000e+00 : f32
      %159 = vector.broadcast %cst_90 : f32 to vector<4x4x1xf32>
      %c0_91 = arith.constant 0 : index
      %c0_92 = arith.constant 0 : index
      %c0_93 = arith.constant 0 : index
      %160 = vector.load %arg12[%c0_91, %c0_92, %c0_93] : memref<4x4x1xf32, #tpu.memory_space<vmem>>, vector<4x4x1xf32>
      tpu.vector_store %arg12[%c0_91, %c0_92, %c0_93], %159 {strides = array<i32>} : memref<4x4x1xf32, #tpu.memory_space<vmem>>, vector<4x4x1xf32>,
      %cst_94 = arith.constant 0.000000e+00 : f32
      %161 = vector.broadcast %cst_94 : f32 to vector<4x32xf32>
      %c0_95 = arith.constant 0 : index
      %c0_96 = arith.constant 0 : index
      %162 = vector.load %arg10[%c0_95, %c0_96] : memref<4x32xf32, #tpu.memory_space<vmem>>, vector<4x32xf32>
      tpu.vector_store %arg10[%c0_95, %c0_96], %161 {strides = array<i32>} : memref<4x32xf32, #tpu.memory_space<vmem>>, vector<4x32xf32>,
    } else {
    }
    %c0 = arith.constant 0 : index
    %c0_1 = arith.constant 0 : index
    %c0_2 = arith.constant 0 : index
    %3 = vector.load %arg3[%c0, %c0_1, %c0_2] : memref<1x16x32xbf16, #tpu.memory_space<vmem>>, vector<1x16x32xbf16>
    %4 = vector.shape_cast %3 : vector<1x16x32xbf16> to vector<16x32xbf16>
    %c0_3 = arith.constant 0 : index
    %c0_4 = arith.constant 0 : index
    %5 = vector.load %arg5[%c0_3, %c0_4] : memref<32x64xbf16, #tpu.memory_space<vmem>>, vector<32x64xbf16>
    %cst_5 = arith.constant dense<0.000000e+00> : vector<16x64xf32>
    %6 = tpu.matmul %4, %5, %cst_5 {dimension_numbers = #tpu.dot_dimension_numbers<[1], [0], [0], [1], [0, 0, 1, 1], [], []>} : vector<16x32xbf16>, vector<32x64xbf16>, vector<16x64xf32> -> vector<16x64xf32>
    %7 = arith.truncf %6 : vector<16x64xf32> to vector<16x64xbf16>
    %c0_6 = arith.constant 0 : index
    %c0_7 = arith.constant 0 : index
    %8 = vector.load %arg9[%c0_6, %c0_7] : memref<16x64xbf16, #tpu.memory_space<vmem>>, vector<16x64xbf16>
    tpu.vector_store %arg9[%c0_6, %c0_7], %7 {strides = array<i32>} : memref<16x64xbf16, #tpu.memory_space<vmem>>, vector<16x64xbf16>,
    %c0_8 = arith.constant 0 : index
    %c0_9 = arith.constant 0 : index
    %c0_10 = arith.constant 0 : index
    %9 = vector.load %arg2[%c0_8, %c0_9, %c0_10] : memref<1x4x32xbf16, #tpu.memory_space<vmem>>, vector<1x4x32xbf16>
    %10 = vector.shape_cast %9 : vector<1x4x32xbf16> to vector<4x32xbf16>
    %c0_11 = arith.constant 0 : index
    %c0_12 = arith.constant 0 : index
    %11 = vector.load %arg9[%c0_11, %c0_12] : memref<16x64xbf16, #tpu.memory_space<vmem>>, vector<16x32xbf16>
    %c0_13 = arith.constant 0 : index
    %c32 = arith.constant 32 : index
    %12 = vector.load %arg9[%c0_13, %c32] : memref<16x64xbf16, #tpu.memory_space<vmem>>, vector<16x32xbf16>
    %c0_14 = arith.constant 0 : index
    %c0_15 = arith.constant 0 : index
    %c0_16 = arith.constant 0 : index
    %13 = vector.load %arg4[%c0_14, %c0_15, %c0_16] : memref<1x1x16xf32, #tpu.memory_space<vmem>>, vector<1x1x16xf32>
    %14 = vector.shape_cast %13 : vector<1x1x16xf32> to vector<1x16xf32>
    %cst_17 = arith.constant 0.000000e+00 : f32
    %15 = vector.broadcast %cst_17 : f32 to vector<1x16xf32>
    %16 = arith.cmpf oeq, %14, %15 : vector<1x16xf32>
    %cst_18 = arith.constant -1.000000e+30 : f32
    %cst_19 = arith.constant 0.000000e+00 : f32
    %17 = vector.broadcast %cst_18 : f32 to vector<1x16xf32>
    %18 = vector.broadcast %cst_19 : f32 to vector<1x16xf32>
    %19 = arith.select %16, %17, %18 : vector<1x16xi1>, vector<1x16xf32>
    %c0_20 = arith.constant 0 : index
    %c0_21 = arith.constant 0 : index
    %20 = vector.load %arg10[%c0_20, %c0_21] : memref<4x32xf32, #tpu.memory_space<vmem>>, vector<4x32xf32>
    %21 = vector.extract_strided_slice %10 {offsets = [0, 0], sizes = [4, 8], strides = [1, 1]} : vector<4x32xbf16> to vector<4x8xbf16>
    %22 = vector.extract_strided_slice %11 {offsets = [0, 0], sizes = [16, 8], strides = [1, 1]} : vector<16x32xbf16> to vector<16x8xbf16>
    %cst_22 = arith.constant dense<0.000000e+00> : vector<4x16xf32>
    %23 = tpu.matmul %21, %22, %cst_22 {dimension_numbers = #tpu.dot_dimension_numbers<[1], [1], [0], [0], [0, 0, 1, 0], [], []>} : vector<4x8xbf16>, vector<16x8xbf16>, vector<4x16xf32> -> vector<4x16xf32>
    %24 = vector.broadcast %19 : vector<1x16xf32> to vector<4x16xf32>
    %25 = arith.addf %23, %24 : vector<4x16xf32>
    %c0_23 = arith.constant 0 : index
    %c0_24 = arith.constant 0 : index
    %c0_25 = arith.constant 0 : index
    %26 = vector.load %arg11[%c0_23, %c0_24, %c0_25] : memref<4x4x1xf32, #tpu.memory_space<vmem>>, vector<1x4x1xf32>
    %27 = vector.shape_cast %26 : vector<1x4x1xf32> to vector<4x1xf32>
    %cst_26 = arith.constant dense<0xFF800000> : vector<4xf32>
    %28 = vector.multi_reduction <maximumf>, %25, %cst_26 [1] : vector<4x16xf32> to vector<4xf32>
    %29 = vector.shape_cast %28 : vector<4xf32> to vector<4x1xf32>
    %30 = arith.maximumf %27, %29 : vector<4x1xf32>
    %31 = arith.subf %27, %30 : vector<4x1xf32>
    %32 = math.exp %31 : vector<4x1xf32>
    %33 = vector.broadcast %30 : vector<4x1xf32> to vector<4x16xf32>
    %34 = arith.subf %25, %33 : vector<4x16xf32>
    %35 = math.exp %34 : vector<4x16xf32>
    %c0_27 = arith.constant 0 : index
    %c0_28 = arith.constant 0 : index
    %c0_29 = arith.constant 0 : index
    %36 = vector.load %arg12[%c0_27, %c0_28, %c0_29] : memref<4x4x1xf32, #tpu.memory_space<vmem>>, vector<1x4x1xf32>
    %37 = vector.shape_cast %36 : vector<1x4x1xf32> to vector<4x1xf32>
    %38 = arith.mulf %32, %37 : vector<4x1xf32>
    %cst_30 = arith.constant dense<0.000000e+00> : vector<4xf32>
    %39 = vector.multi_reduction <add>, %35, %cst_30 [1] : vector<4x16xf32> to vector<4xf32>
    %40 = vector.shape_cast %39 : vector<4xf32> to vector<4x1xf32>
    %41 = arith.addf %38, %40 : vector<4x1xf32>
    %c0_31 = arith.constant 0 : index
    %c0_32 = arith.constant 0 : index
    %c0_33 = arith.constant 0 : index
    %42 = vector.load %arg12[%c0_31, %c0_32, %c0_33] : memref<4x4x1xf32, #tpu.memory_space<vmem>>, vector<1x4x1xf32>
    %43 = vector.shape_cast %42 : vector<1x4x1xf32> to vector<4x1xf32>
    %44 = vector.shape_cast %41 : vector<4x1xf32> to vector<1x4x1xf32>
    tpu.vector_store %arg12[%c0_31, %c0_32, %c0_33], %44 {strides = array<i32>} : memref<4x4x1xf32, #tpu.memory_space<vmem>>, vector<1x4x1xf32>,
    %c0_34 = arith.constant 0 : index
    %c0_35 = arith.constant 0 : index
    %c0_36 = arith.constant 0 : index
    %45 = vector.load %arg11[%c0_34, %c0_35, %c0_36] : memref<4x4x1xf32, #tpu.memory_space<vmem>>, vector<1x4x1xf32>
    %46 = vector.shape_cast %45 : vector<1x4x1xf32> to vector<4x1xf32>
    %47 = vector.shape_cast %30 : vector<4x1xf32> to vector<1x4x1xf32>
    tpu.vector_store %arg11[%c0_34, %c0_35, %c0_36], %47 {strides = array<i32>} : memref<4x4x1xf32, #tpu.memory_space<vmem>>, vector<1x4x1xf32>,
    %48 = arith.truncf %35 : vector<4x16xf32> to vector<4x16xbf16>
    %49 = vector.extract_strided_slice %12 {offsets = [0, 0], sizes = [16, 8], strides = [1, 1]} : vector<16x32xbf16> to vector<16x8xbf16>
    %cst_37 = arith.constant dense<0.000000e+00> : vector<4x8xf32>
    %50 = tpu.matmul %48, %49, %cst_37 {dimension_numbers = #tpu.dot_dimension_numbers<[1], [0], [0], [1], [0, 0, 1, 1], [], []>} : vector<4x16xbf16>, vector<16x8xbf16>, vector<4x8xf32> -> vector<4x8xf32>
    %51 = vector.shape_cast %32 : vector<4x1xf32> to vector<4x1xf32>
    %52 = vector.broadcast %51 : vector<4x1xf32> to vector<4x8xf32>
    %53 = vector.extract_strided_slice %10 {offsets = [0, 8], sizes = [4, 8], strides = [1, 1]} : vector<4x32xbf16> to vector<4x8xbf16>
    %54 = vector.extract_strided_slice %11 {offsets = [0, 8], sizes = [16, 8], strides = [1, 1]} : vector<16x32xbf16> to vector<16x8xbf16>
    %cst_38 = arith.constant dense<0.000000e+00> : vector<4x16xf32>
    %55 = tpu.matmul %53, %54, %cst_38 {dimension_numbers = #tpu.dot_dimension_numbers<[1], [1], [0], [0], [0, 0, 1, 0], [], []>} : vector<4x8xbf16>, vector<16x8xbf16>, vector<4x16xf32> -> vector<4x16xf32>
    %56 = vector.broadcast %19 : vector<1x16xf32> to vector<4x16xf32>
    %57 = arith.addf %55, %56 : vector<4x16xf32>
    %c1 = arith.constant 1 : index
    %c0_39 = arith.constant 0 : index
    %c0_40 = arith.constant 0 : index
    %58 = vector.load %arg11[%c1, %c0_39, %c0_40] : memref<4x4x1xf32, #tpu.memory_space<vmem>>, vector<1x4x1xf32>
    %59 = vector.shape_cast %58 : vector<1x4x1xf32> to vector<4x1xf32>
    %cst_41 = arith.constant dense<0xFF800000> : vector<4xf32>
    %60 = vector.multi_reduction <maximumf>, %57, %cst_41 [1] : vector<4x16xf32> to vector<4xf32>
    %61 = vector.shape_cast %60 : vector<4xf32> to vector<4x1xf32>
    %62 = arith.maximumf %59, %61 : vector<4x1xf32>
    %63 = arith.subf %59, %62 : vector<4x1xf32>
    %64 = math.exp %63 : vector<4x1xf32>
    %65 = vector.broadcast %62 : vector<4x1xf32> to vector<4x16xf32>
    %66 = arith.subf %57, %65 : vector<4x16xf32>
    %67 = math.exp %66 : vector<4x16xf32>
    %c1_42 = arith.constant 1 : index
    %c0_43 = arith.constant 0 : index
    %c0_44 = arith.constant 0 : index
    %68 = vector.load %arg12[%c1_42, %c0_43, %c0_44] : memref<4x4x1xf32, #tpu.memory_space<vmem>>, vector<1x4x1xf32>
    %69 = vector.shape_cast %68 : vector<1x4x1xf32> to vector<4x1xf32>
    %70 = arith.mulf %64, %69 : vector<4x1xf32>
    %cst_45 = arith.constant dense<0.000000e+00> : vector<4xf32>
    %71 = vector.multi_reduction <add>, %67, %cst_45 [1] : vector<4x16xf32> to vector<4xf32>
    %72 = vector.shape_cast %71 : vector<4xf32> to vector<4x1xf32>
    %73 = arith.addf %70, %72 : vector<4x1xf32>
    %c1_46 = arith.constant 1 : index
    %c0_47 = arith.constant 0 : index
    %c0_48 = arith.constant 0 : index
    %74 = vector.load %arg12[%c1_46, %c0_47, %c0_48] : memref<4x4x1xf32, #tpu.memory_space<vmem>>, vector<1x4x1xf32>
    %75 = vector.shape_cast %74 : vector<1x4x1xf32> to vector<4x1xf32>
    %76 = vector.shape_cast %73 : vector<4x1xf32> to vector<1x4x1xf32>
    tpu.vector_store %arg12[%c1_46, %c0_47, %c0_48], %76 {strides = array<i32>} : memref<4x4x1xf32, #tpu.memory_space<vmem>>, vector<1x4x1xf32>,
    %c1_49 = arith.constant 1 : index
    %c0_50 = arith.constant 0 : index
    %c0_51 = arith.constant 0 : index
    %77 = vector.load %arg11[%c1_49, %c0_50, %c0_51] : memref<4x4x1xf32, #tpu.memory_space<vmem>>, vector<1x4x1xf32>
    %78 = vector.shape_cast %77 : vector<1x4x1xf32> to vector<4x1xf32>
    %79 = vector.shape_cast %62 : vector<4x1xf32> to vector<1x4x1xf32>
    tpu.vector_store %arg11[%c1_49, %c0_50, %c0_51], %79 {strides = array<i32>} : memref<4x4x1xf32, #tpu.memory_space<vmem>>, vector<1x4x1xf32>,
    %80 = arith.truncf %67 : vector<4x16xf32> to vector<4x16xbf16>
    %81 = vector.extract_strided_slice %12 {offsets = [0, 8], sizes = [16, 8], strides = [1, 1]} : vector<16x32xbf16> to vector<16x8xbf16>
    %cst_52 = arith.constant dense<0.000000e+00> : vector<4x8xf32>
    %82 = tpu.matmul %80, %81, %cst_52 {dimension_numbers = #tpu.dot_dimension_numbers<[1], [0], [0], [1], [0, 0, 1, 1], [], []>} : vector<4x16xbf16>, vector<16x8xbf16>, vector<4x8xf32> -> vector<4x8xf32>
    %83 = vector.shape_cast %64 : vector<4x1xf32> to vector<4x1xf32>
    %84 = vector.broadcast %83 : vector<4x1xf32> to vector<4x8xf32>
    %85 = vector.extract_strided_slice %10 {offsets = [0, 16], sizes = [4, 8], strides = [1, 1]} : vector<4x32xbf16> to vector<4x8xbf16>
    %86 = vector.extract_strided_slice %11 {offsets = [0, 16], sizes = [16, 8], strides = [1, 1]} : vector<16x32xbf16> to vector<16x8xbf16>
    %cst_53 = arith.constant dense<0.000000e+00> : vector<4x16xf32>
    %87 = tpu.matmul %85, %86, %cst_53 {dimension_numbers = #tpu.dot_dimension_numbers<[1], [1], [0], [0], [0, 0, 1, 0], [], []>} : vector<4x8xbf16>, vector<16x8xbf16>, vector<4x16xf32> -> vector<4x16xf32>
    %88 = vector.broadcast %19 : vector<1x16xf32> to vector<4x16xf32>
    %89 = arith.addf %87, %88 : vector<4x16xf32>
    %c2 = arith.constant 2 : index
    %c0_54 = arith.constant 0 : index
    %c0_55 = arith.constant 0 : index
    %90 = vector.load %arg11[%c2, %c0_54, %c0_55] : memref<4x4x1xf32, #tpu.memory_space<vmem>>, vector<1x4x1xf32>
    %91 = vector.shape_cast %90 : vector<1x4x1xf32> to vector<4x1xf32>
    %cst_56 = arith.constant dense<0xFF800000> : vector<4xf32>
    %92 = vector.multi_reduction <maximumf>, %89, %cst_56 [1] : vector<4x16xf32> to vector<4xf32>
    %93 = vector.shape_cast %92 : vector<4xf32> to vector<4x1xf32>
    %94 = arith.maximumf %91, %93 : vector<4x1xf32>
    %95 = arith.subf %91, %94 : vector<4x1xf32>
    %96 = math.exp %95 : vector<4x1xf32>
    %97 = vector.broadcast %94 : vector<4x1xf32> to vector<4x16xf32>
    %98 = arith.subf %89, %97 : vector<4x16xf32>
    %99 = math.exp %98 : vector<4x16xf32>
    %c2_57 = arith.constant 2 : index
    %c0_58 = arith.constant 0 : index
    %c0_59 = arith.constant 0 : index
    %100 = vector.load %arg12[%c2_57, %c0_58, %c0_59] : memref<4x4x1xf32, #tpu.memory_space<vmem>>, vector<1x4x1xf32>
    %101 = vector.shape_cast %100 : vector<1x4x1xf32> to vector<4x1xf32>
    %102 = arith.mulf %96, %101 : vector<4x1xf32>
    %cst_60 = arith.constant dense<0.000000e+00> : vector<4xf32>
    %103 = vector.multi_reduction <add>, %99, %cst_60 [1] : vector<4x16xf32> to vector<4xf32>
    %104 = vector.shape_cast %103 : vector<4xf32> to vector<4x1xf32>
    %105 = arith.addf %102, %104 : vector<4x1xf32>
    %c2_61 = arith.constant 2 : index
    %c0_62 = arith.constant 0 : index
    %c0_63 = arith.constant 0 : index
    %106 = vector.load %arg12[%c2_61, %c0_62, %c0_63] : memref<4x4x1xf32, #tpu.memory_space<vmem>>, vector<1x4x1xf32>
    %107 = vector.shape_cast %106 : vector<1x4x1xf32> to vector<4x1xf32>
    %108 = vector.shape_cast %105 : vector<4x1xf32> to vector<1x4x1xf32>
    tpu.vector_store %arg12[%c2_61, %c0_62, %c0_63], %108 {strides = array<i32>} : memref<4x4x1xf32, #tpu.memory_space<vmem>>, vector<1x4x1xf32>,
    %c2_64 = arith.constant 2 : index
    %c0_65 = arith.constant 0 : index
    %c0_66 = arith.constant 0 : index
    %109 = vector.load %arg11[%c2_64, %c0_65, %c0_66] : memref<4x4x1xf32, #tpu.memory_space<vmem>>, vector<1x4x1xf32>
    %110 = vector.shape_cast %109 : vector<1x4x1xf32> to vector<4x1xf32>
    %111 = vector.shape_cast %94 : vector<4x1xf32> to vector<1x4x1xf32>
    tpu.vector_store %arg11[%c2_64, %c0_65, %c0_66], %111 {strides = array<i32>} : memref<4x4x1xf32, #tpu.memory_space<vmem>>, vector<1x4x1xf32>,
    %112 = arith.truncf %99 : vector<4x16xf32> to vector<4x16xbf16>
    %113 = vector.extract_strided_slice %12 {offsets = [0, 16], sizes = [16, 8], strides = [1, 1]} : vector<16x32xbf16> to vector<16x8xbf16>
    %cst_67 = arith.constant dense<0.000000e+00> : vector<4x8xf32>
    %114 = tpu.matmul %112, %113, %cst_67 {dimension_numbers = #tpu.dot_dimension_numbers<[1], [0], [0], [1], [0, 0, 1, 1], [], []>} : vector<4x16xbf16>, vector<16x8xbf16>, vector<4x8xf32> -> vector<4x8xf32>
    %115 = vector.shape_cast %96 : vector<4x1xf32> to vector<4x1xf32>
    %116 = vector.broadcast %115 : vector<4x1xf32> to vector<4x8xf32>
    %117 = vector.extract_strided_slice %10 {offsets = [0, 24], sizes = [4, 8], strides = [1, 1]} : vector<4x32xbf16> to vector<4x8xbf16>
    %118 = vector.extract_strided_slice %11 {offsets = [0, 24], sizes = [16, 8], strides = [1, 1]} : vector<16x32xbf16> to vector<16x8xbf16>
    %cst_68 = arith.constant dense<0.000000e+00> : vector<4x16xf32>
    %119 = tpu.matmul %117, %118, %cst_68 {dimension_numbers = #tpu.dot_dimension_numbers<[1], [1], [0], [0], [0, 0, 1, 0], [], []>} : vector<4x8xbf16>, vector<16x8xbf16>, vector<4x16xf32> -> vector<4x16xf32>
    %120 = vector.broadcast %19 : vector<1x16xf32> to vector<4x16xf32>
    %121 = arith.addf %119, %120 : vector<4x16xf32>
    %c3 = arith.constant 3 : index
    %c0_69 = arith.constant 0 : index
    %c0_70 = arith.constant 0 : index
    %122 = vector.load %arg11[%c3, %c0_69, %c0_70] : memref<4x4x1xf32, #tpu.memory_space<vmem>>, vector<1x4x1xf32>
    %123 = vector.shape_cast %122 : vector<1x4x1xf32> to vector<4x1xf32>
    %cst_71 = arith.constant dense<0xFF800000> : vector<4xf32>
    %124 = vector.multi_reduction <maximumf>, %121, %cst_71 [1] : vector<4x16xf32> to vector<4xf32>
    %125 = vector.shape_cast %124 : vector<4xf32> to vector<4x1xf32>
    %126 = arith.maximumf %123, %125 : vector<4x1xf32>
    %127 = arith.subf %123, %126 : vector<4x1xf32>
    %128 = math.exp %127 : vector<4x1xf32>
    %129 = vector.broadcast %126 : vector<4x1xf32> to vector<4x16xf32>
    %130 = arith.subf %121, %129 : vector<4x16xf32>
    %131 = math.exp %130 : vector<4x16xf32>
    %c3_72 = arith.constant 3 : index
    %c0_73 = arith.constant 0 : index
    %c0_74 = arith.constant 0 : index
    %132 = vector.load %arg12[%c3_72, %c0_73, %c0_74] : memref<4x4x1xf32, #tpu.memory_space<vmem>>, vector<1x4x1xf32>
    %133 = vector.shape_cast %132 : vector<1x4x1xf32> to vector<4x1xf32>
    %134 = arith.mulf %128, %133 : vector<4x1xf32>
    %cst_75 = arith.constant dense<0.000000e+00> : vector<4xf32>
    %135 = vector.multi_reduction <add>, %131, %cst_75 [1] : vector<4x16xf32> to vector<4xf32>
    %136 = vector.shape_cast %135 : vector<4xf32> to vector<4x1xf32>
    %137 = arith.addf %134, %136 : vector<4x1xf32>
    %c3_76 = arith.constant 3 : index
    %c0_77 = arith.constant 0 : index
    %c0_78 = arith.constant 0 : index
    %138 = vector.load %arg12[%c3_76, %c0_77, %c0_78] : memref<4x4x1xf32, #tpu.memory_space<vmem>>, vector<1x4x1xf32>
    %139 = vector.shape_cast %138 : vector<1x4x1xf32> to vector<4x1xf32>
    %140 = vector.shape_cast %137 : vector<4x1xf32> to vector<1x4x1xf32>
    tpu.vector_store %arg12[%c3_76, %c0_77, %c0_78], %140 {strides = array<i32>} : memref<4x4x1xf32, #tpu.memory_space<vmem>>, vector<1x4x1xf32>,
    %c3_79 = arith.constant 3 : index
    %c0_80 = arith.constant 0 : index
    %c0_81 = arith.constant 0 : index
    %141 = vector.load %arg11[%c3_79, %c0_80, %c0_81] : memref<4x4x1xf32, #tpu.memory_space<vmem>>, vector<1x4x1xf32>
    %142 = vector.shape_cast %141 : vector<1x4x1xf32> to vector<4x1xf32>
    %143 = vector.shape_cast %126 : vector<4x1xf32> to vector<1x4x1xf32>
    tpu.vector_store %arg11[%c3_79, %c0_80, %c0_81], %143 {strides = array<i32>} : memref<4x4x1xf32, #tpu.memory_space<vmem>>, vector<1x4x1xf32>,
    %144 = arith.truncf %131 : vector<4x16xf32> to vector<4x16xbf16>
    %145 = vector.extract_strided_slice %12 {offsets = [0, 24], sizes = [16, 8], strides = [1, 1]} : vector<16x32xbf16> to vector<16x8xbf16>
    %cst_82 = arith.constant dense<0.000000e+00> : vector<4x8xf32>
    %146 = tpu.matmul %144, %145, %cst_82 {dimension_numbers = #tpu.dot_dimension_numbers<[1], [0], [0], [1], [0, 0, 1, 1], [], []>} : vector<4x16xbf16>, vector<16x8xbf16>, vector<4x8xf32> -> vector<4x8xf32>
    %147 = vector.shape_cast %128 : vector<4x1xf32> to vector<4x1xf32>
    %148 = vector.broadcast %147 : vector<4x1xf32> to vector<4x8xf32>
    %149 = tpu.concatenate %52, %84, %116, %148 in 1 : vector<4x8xf32>, vector<4x8xf32>, vector<4x8xf32>, vector<4x8xf32> -> vector<4x32xf32>
    %150 = arith.mulf %149, %20 : vector<4x32xf32>
    %151 = tpu.concatenate %50, %82, %114, %146 in 1 : vector<4x8xf32>, vector<4x8xf32>, vector<4x8xf32>, vector<4x8xf32> -> vector<4x32xf32>
    %152 = arith.addf %150, %151 : vector<4x32xf32>
    %c0_83 = arith.constant 0 : index
    %c0_84 = arith.constant 0 : index
    %153 = vector.load %arg10[%c0_83, %c0_84] : memref<4x32xf32, #tpu.memory_space<vmem>>, vector<4x32xf32>
    tpu.vector_store %arg10[%c0_83, %c0_84], %152 {strides = array<i32>} : memref<4x32xf32, #tpu.memory_space<vmem>>, vector<4x32xf32>,
    %c0_i32_85 = arith.constant 0 : i32
    %154 = arith.cmpi eq, %arg1, %c0_i32_85 : i32
    %155 = arith.extui %154 : i1 to i32
    %c0_i32_86 = arith.constant 0 : i32
    %156 = arith.cmpi ne, %155, %c0_i32_86 : i32
    scf.if %156 {
      %c0_87 = arith.constant 0 : index
      %c0_88 = arith.constant 0 : index
      %157 = vector.load %arg10[%c0_87, %c0_88] : memref<4x32xf32, #tpu.memory_space<vmem>>, vector<4x32xf32>
      %c0_89 = arith.constant 0 : index
      %c0_90 = arith.constant 0 : index
      %c0_91 = arith.constant 0 : index
      %158 = vector.load %arg12[%c0_89, %c0_90, %c0_91] : memref<4x4x1xf32, #tpu.memory_space<vmem>>, vector<1x4x1xf32>
      %159 = vector.shape_cast %158 : vector<1x4x1xf32> to vector<4x1xf32>
      %160 = tpu.reciprocal %159 {approx = true} : vector<4x1xf32> -> vector<4x1xf32>
      %161 = vector.extract_strided_slice %157 {offsets = [0, 0], sizes = [4, 8], strides = [1, 1]} : vector<4x32xf32> to vector<4x8xf32>
      %162 = vector.broadcast %160 : vector<4x1xf32> to vector<4x8xf32>
      %163 = arith.mulf %161, %162 : vector<4x8xf32>
      %164 = arith.truncf %163 : vector<4x8xf32> to vector<4x8xbf16>
      %c1_92 = arith.constant 1 : index
      %c0_93 = arith.constant 0 : index
      %c0_94 = arith.constant 0 : index
      %165 = vector.load %arg12[%c1_92, %c0_93, %c0_94] : memref<4x4x1xf32, #tpu.memory_space<vmem>>, vector<1x4x1xf32>
      %166 = vector.shape_cast %165 : vector<1x4x1xf32> to vector<4x1xf32>
      %167 = tpu.reciprocal %166 {approx = true} : vector<4x1xf32> -> vector<4x1xf32>
      %168 = vector.extract_strided_slice %157 {offsets = [0, 8], sizes = [4, 8], strides = [1, 1]} : vector<4x32xf32> to vector<4x8xf32>
      %169 = vector.broadcast %167 : vector<4x1xf32> to vector<4x8xf32>
      %170 = arith.mulf %168, %169 : vector<4x8xf32>
      %171 = arith.truncf %170 : vector<4x8xf32> to vector<4x8xbf16>
      %c2_95 = arith.constant 2 : index
      %c0_96 = arith.constant 0 : index
      %c0_97 = arith.constant 0 : index
      %172 = vector.load %arg12[%c2_95, %c0_96, %c0_97] : memref<4x4x1xf32, #tpu.memory_space<vmem>>, vector<1x4x1xf32>
      %173 = vector.shape_cast %172 : vector<1x4x1xf32> to vector<4x1xf32>
      %174 = tpu.reciprocal %173 {approx = true} : vector<4x1xf32> -> vector<4x1xf32>
      %175 = vector.extract_strided_slice %157 {offsets = [0, 16], sizes = [4, 8], strides = [1, 1]} : vector<4x32xf32> to vector<4x8xf32>
      %176 = vector.broadcast %174 : vector<4x1xf32> to vector<4x8xf32>
      %177 = arith.mulf %175, %176 : vector<4x8xf32>
      %178 = arith.truncf %177 : vector<4x8xf32> to vector<4x8xbf16>
      %c3_98 = arith.constant 3 : index
      %c0_99 = arith.constant 0 : index
      %c0_100 = arith.constant 0 : index
      %179 = vector.load %arg12[%c3_98, %c0_99, %c0_100] : memref<4x4x1xf32, #tpu.memory_space<vmem>>, vector<1x4x1xf32>
      %180 = vector.shape_cast %179 : vector<1x4x1xf32> to vector<4x1xf32>
      %181 = tpu.reciprocal %180 {approx = true} : vector<4x1xf32> -> vector<4x1xf32>
      %182 = vector.extract_strided_slice %157 {offsets = [0, 24], sizes = [4, 8], strides = [1, 1]} : vector<4x32xf32> to vector<4x8xf32>
      %183 = vector.broadcast %181 : vector<4x1xf32> to vector<4x8xf32>
      %184 = arith.mulf %182, %183 : vector<4x8xf32>
      %185 = arith.truncf %184 : vector<4x8xf32> to vector<4x8xbf16>
      %186 = tpu.concatenate %164, %171, %178, %185 in 1 : vector<4x8xbf16>, vector<4x8xbf16>, vector<4x8xbf16>, vector<4x8xbf16> -> vector<4x32xbf16>
      %c0_101 = arith.constant 0 : index
      %c0_102 = arith.constant 0 : index
      %187 = vector.load %arg6[%c0_101, %c0_102] : memref<32x32xbf16, #tpu.memory_space<vmem>>, vector<32x32xbf16>
      %cst_103 = arith.constant dense<0.000000e+00> : vector<4x32xf32>
      %188 = tpu.matmul %186, %187, %cst_103 {dimension_numbers = #tpu.dot_dimension_numbers<[1], [0], [0], [1], [0, 0, 1, 1], [], []>} : vector<4x32xbf16>, vector<32x32xbf16>, vector<4x32xf32> -> vector<4x32xf32>
      %c0_104 = arith.constant 0 : index
      %c0_105 = arith.constant 0 : index
      %189 = vector.load %arg7[%c0_104, %c0_105] : memref<1x32xf32, #tpu.memory_space<vmem>>, vector<1x32xf32>
      %190 = vector.broadcast %189 : vector<1x32xf32> to vector<4x32xf32>
      %191 = arith.addf %188, %190 : vector<4x32xf32>
      %192 = vector.shape_cast %191 : vector<4x32xf32> to vector<1x4x32xf32>
      %c0_106 = arith.constant 0 : index
      %c0_107 = arith.constant 0 : index
      %c0_108 = arith.constant 0 : index
      %193 = vector.load %arg8[%c0_106, %c0_107, %c0_108] : memref<1x4x32xf32, #tpu.memory_space<vmem>>, vector<1x4x32xf32>
      tpu.vector_store %arg8[%c0_106, %c0_107, %c0_108], %192 {strides = array<i32>} : memref<1x4x32xf32, #tpu.memory_space<vmem>>, vector<1x4x32xf32>,
    } else {
    }
    return
  }
  func.func @transform_0(%arg0: i32, %arg1: i32) -> (i32, i32, i32) {
    %c0_i32 = arith.constant 0 : i32
    %c0_i32_0 = arith.constant 0 : i32
    %c0_i32_1 = arith.constant 0 : i32
    return %arg0, %c0_i32, %c0_i32_0 : i32, i32, i32
  }
  func.func @transform_1(%arg0: i32, %arg1: i32) -> (i32, i32, i32) {
    %c0_i32 = arith.constant 0 : i32
    %c0_i32_0 = arith.constant 0 : i32
    return %arg0, %arg1, %c0_i32 : i32, i32, i32
  }
  func.func @transform_2(%arg0: i32, %arg1: i32) -> (i32, i32, i32) {
    %c0_i32 = arith.constant 0 : i32
    %c0_i32_0 = arith.constant 0 : i32
    return %arg0, %c0_i32, %arg1 : i32, i32, i32
  }
  func.func @transform_3(%arg0: i32, %arg1: i32) -> (i32, i32) {
    %c0_i32 = arith.constant 0 : i32
    %c0_i32_0 = arith.constant 0 : i32
    %c0_i32_1 = arith.constant 0 : i32
    return %c0_i32, %c0_i32_0 : i32, i32
  }
  func.func @transform_4(%arg0: i32, %arg1: i32) -> (i32, i32) {
    %c0_i32 = arith.constant 0 : i32
    %c0_i32_0 = arith.constant 0 : i32
    %c0_i32_1 = arith.constant 0 : i32
    return %c0_i32, %c0_i32_0 : i32, i32
  }
  func.func @transform_5(%arg0: i32, %arg1: i32) -> (i32, i32) {
    %c0_i32 = arith.constant 0 : i32
    %c0_i32_0 = arith.constant 0 : i32
    %c0_i32_1 = arith.constant 0 : i32
    return %c0_i32, %c0_i32_0 : i32, i32
  }
  func.func @transform_6(%arg0: i32, %arg1: i32) -> (i32, i32, i32) {
    %c0_i32 = arith.constant 0 : i32
    %c0_i32_0 = arith.constant 0 : i32
    %c0_i32_1 = arith.constant 0 : i32
    return %arg0, %c0_i32, %c0_i32_0 : i32, i32, i32
  }
}

</mosaic_0001>

<llo_original>
// kernel: tpu_custom_call.1
$region0: #{tpu_custom_call.1}
  #allocation0 [shape = 'u32[]', space=smem, size = 0x4, offset = 0x4, fixed_abs, tag = 'smem constant byte address 0x4 - core index']
  #allocation1 [shape = 'u32[72,128]{1,0:T(1,128)}', space=vmem, size = 0x9000, scoped, tag = 'internal scratch']
  #allocation2 [shape = 'bf16[16,64]{1,0:T(8,128)(2,1)}', space=vmem, size = 0x1000, scoped, tag = 'scratch operand']
  #allocation3 [shape = 'f32[4,32]{1,0:T(4,128)}', space=vmem, size = 0x800, scoped, tag = 'scratch operand']
  #allocation4 [shape = 'f32[4,4,1]{2,1,0:T(4,128)}', space=vmem, size = 0x2000, scoped, tag = 'scratch operand']
  #allocation5 [shape = 'f32[4,4,1]{2,1,0:T(4,128)}', space=vmem, size = 0x2000, scoped, tag = 'scratch operand']
  %s0 = inlined_call_operand.hbm [shape: bf16[2,4,32], index: 0, kind: input, shape index: {}]
  %s1 = inlined_call_operand.hbm [shape: bf16[2,16,32], index: 1, kind: input, shape index: {}]
  %s2 = inlined_call_operand.hbm [shape: f32[2,1,16], index: 2, kind: input, shape index: {}]
  %s3 = inlined_call_operand.hbm [shape: bf16[32,64], index: 3, kind: input, shape index: {}]
  %s4 = inlined_call_operand.hbm [shape: bf16[32,32], index: 4, kind: input, shape index: {}]
  %s5 = inlined_call_operand.vmem [shape: f32[1,32], index: 5, kind: input, shape index: {}]
  %s6 = inlined_call_operand.hbm [shape: f32[2,4,32], index: 6, kind: output, shape index: {}]
  %s7 = sld [smem:[#allocation0]]
  $region85: #{tpu_custom_call.1} parent=0
    _
  %s9 = ssub.s32 1, %s7
  %s10 = scalar_select 0, %s9, %s7
  $region1: #{tpu_custom_call.1} parent=0
    #allocation6 [shape = 'u8[2048]{0}', space=vmem, size = 0x800, scoped, tag = 'input window, operand 0']
    #allocation7 [shape = 's32[2]{0}', space=sflag, size = 0x8, scoped, tag = 'scoped memory for tpu_custom_call.1']
    #allocation8 [shape = 's32[2]{0}', space=sflag, size = 0x8, scoped, tag = 'scoped memory for tpu_custom_call.1']
    #allocation9 [shape = 'u8[8192]{0}', space=vmem, size = 0x2000, scoped, tag = 'input window, operand 1']
    #allocation10 [shape = 's32[2]{0}', space=sflag, size = 0x8, scoped, tag = 'scoped memory for tpu_custom_call.1']
    #allocation11 [shape = 'u8[1024]{0}', space=vmem, size = 0x400, scoped, tag = 'input window, operand 2']
    #allocation12 [shape = 'u8[8192]{0}', space=vmem, size = 0x2000, scoped, tag = 'input window, operand 3, single buffered']
    #allocation13 [shape = 's32[1]{0}', space=sflag, size = 0x4, scoped, tag = 'scoped memory for tpu_custom_call.1']
    #allocation14 [shape = 'u8[8192]{0}', space=vmem, size = 0x2000, scoped, tag = 'input window, operand 4, single buffered']
    #allocation15 [shape = 'u8[4096]{0}', space=vmem, size = 0x1000, scoped, tag = 'output window, operand 0']
    %11 = vsyncpa [#allocation7], 0
    %s12 = scalar_lea.sflag [#allocation7], 1
    %13 = vsyncpa %s12, 0
    %14 = vsyncpa [#allocation10], 0
    %s15 = scalar_lea.sflag [#allocation10], 1
    %16 = vsyncpa %s15, 0
    %17 = vsyncpa [#allocation13], 0
    %18 = vsyncpa [#allocation8], 0
    %s19 = scalar_lea.sflag [#allocation8], 1
    %20 = vsyncpa %s19, 0
    loop: start=0, step=1, limit=4
    $region2: #{tpu_custom_call.1} parent=1 // loop_pre_header
      _
    $region3: #{tpu_custom_call.1} parent=1 // loop_header
      %s22 = sphi 0, %s26
      %p23 = scmp.ge.s32.totalorder %s22, 4
      %s29 = sphi 0, %s41
      %s30 = sphi 0, %s37
      %s31 = sphi 0, %s29
      %s32 = sphi 0, %s30
      %s33 = sphi 0, %s31
      %s34 = sphi 0, %s32
      %s44 = sphi 0, %s46
      %s47 = sphi 0, %s44
      %s48 = sphi 0, %s47
      %s64 = sphi 0, %s48
      %s72 = sphi 0, %s74
      %s75 = sphi 0, %s72
      %s76 = sphi 0, %s75
      %s92 = sphi 0, %s76
      %s100 = sphi 0, %s102
      %s103 = sphi 0, %s100
      %s104 = sphi 0, %s103
      %s120 = sphi 0, %s104
      %s124 = sphi 0, %s124
      %s126 = sphi 0, %s124
      %s127 = sphi 0, %s126
      %s141 = sphi 0, %s127
      %s145 = sphi 0, %s145
      %s147 = sphi 0, %s145
      %s148 = sphi 0, %s147
      %s162 = sphi 0, %s148
      %s166 = sphi 0, %s166
      %s168 = sphi 0, %s166
      %s169 = sphi 0, %s168
      %s183 = sphi 0, %s169
      %s189 = sphi 0, %s191
      %s192 = sphi 0, %s189
      %s193 = sphi 0, %s192
      %s209 = sphi 0, %s193
    $region4: #{tpu_custom_call.1} parent=1 // loop_header_branch
      %25 = sbr.rel (%p23) target = $region8
    $region5: #{tpu_custom_call.1} parent=1 // loop_body
      %s27 = ssub.s32 %s22, 1
      %s28 = ssub.s32 %s22, 2
      %s35 = sadd.s32 1, %s30
      %p36 = scmp.ge.s32.totalorder %s35, 1
      %s37 = scalar_select %p36, 0, %s35
      %s38 = sadd.s32 1, %s29
      %s39 = scalar_select %p36, %s38, %s29
      %p40 = scmp.ge.s32.totalorder %s39, 2
      %s41 = scalar_select %p40, 0, %s39
      %s42 = ssub.s32 %s29, %s41
      %p43 = scmp.eq.s32.totalorder %s42, 0
      %s45 = sadd.s32 %s44, 1
      %s46 = scalar_select %p43, %s44, %s45
      %p49 = pneg %p43
      %p50 = scmp.eq.s32.totalorder %s22, 1
      %p51 = por %p49, %p50
      %p52 = scmp.ne.s32.totalorder %s44, %s47
      %p53 = scmp.eq.s32.totalorder %s22, 0
      %p54 = por %p52, %p53
      %p55 = scmp.ne.s32.totalorder %s44, %s47
      %p56 = scmp.eq.s32.totalorder %s27, 1
      %p57 = por %p55, %p56
      %p58 = scmp.ne.s32.totalorder %s47, %s48
      %p59 = scmp.eq.s32.totalorder %s27, 0
      %p60 = por %p58, %p59
      %p61 = scmp.ne.s32.totalorder %s47, %s48
      %p62 = scmp.eq.s32.totalorder %s28, 1
      %p63 = por %p61, %p62
      %p65 = scmp.ne.s32.totalorder %s48, %s64
      %p66 = scmp.eq.s32.totalorder %s28, 0
      %p67 = por %p65, %p66
      %s68 = ssub.s32 %s29, %s41
      %s69 = ssub.s32 %s30, %s37
      %s70 = sor.u32 %s68, %s69
      %p71 = scmp.eq.s32.totalorder %s70, 0
      %s73 = sadd.s32 %s72, 1
      %s74 = scalar_select %p71, %s72, %s73
      %p77 = pneg %p71
      %p78 = scmp.eq.s32.totalorder %s22, 1
      %p79 = por %p77, %p78
      %p80 = scmp.ne.s32.totalorder %s72, %s75
      %p81 = scmp.eq.s32.totalorder %s22, 0
      %p82 = por %p80, %p81
      %p83 = scmp.ne.s32.totalorder %s72, %s75
      %p84 = scmp.eq.s32.totalorder %s27, 1
      %p85 = por %p83, %p84
      %p86 = scmp.ne.s32.totalorder %s75, %s76
      %p87 = scmp.eq.s32.totalorder %s27, 0
      %p88 = por %p86, %p87
      %p89 = scmp.ne.s32.totalorder %s75, %s76
      %p90 = scmp.eq.s32.totalorder %s28, 1
      %p91 = por %p89, %p90
      %p93 = scmp.ne.s32.totalorder %s76, %s92
      %p94 = scmp.eq.s32.totalorder %s28, 0
      %p95 = por %p93, %p94
      %s96 = ssub.s32 %s29, %s41
      %s97 = ssub.s32 %s30, %s37
      %s98 = sor.u32 %s96, %s97
      %p99 = scmp.eq.s32.totalorder %s98, 0
      %s101 = sadd.s32 %s100, 1
      %s102 = scalar_select %p99, %s100, %s101
      %p105 = pneg %p99
      %p106 = scmp.eq.s32.totalorder %s22, 1
      %p107 = por %p105, %p106
      %p108 = scmp.ne.s32.totalorder %s100, %s103
      %p109 = scmp.eq.s32.totalorder %s22, 0
      %p110 = por %p108, %p109
      %p111 = scmp.ne.s32.totalorder %s100, %s103
      %p112 = scmp.eq.s32.totalorder %s27, 1
      %p113 = por %p111, %p112
      %p114 = scmp.ne.s32.totalorder %s103, %s104
      %p115 = scmp.eq.s32.totalorder %s27, 0
      %p116 = por %p114, %p115
      %p117 = scmp.ne.s32.totalorder %s103, %s104
      %p118 = scmp.eq.s32.totalorder %s28, 1
      %p119 = por %p117, %p118
      %p121 = scmp.ne.s32.totalorder %s104, %s120
      %p122 = scmp.eq.s32.totalorder %s28, 0
      %p123 = por %p121, %p122
      %s125 = sadd.s32 %s124, 1
      %p128 = scmp.eq.s32.totalorder %s22, 1
      %p129 = scmp.ne.s32.totalorder %s124, %s126
      %p130 = scmp.eq.s32.totalorder %s22, 0
      %p131 = por %p129, %p130
      %p132 = scmp.ne.s32.totalorder %s124, %s126
      %p133 = scmp.eq.s32.totalorder %s27, 1
      %p134 = por %p132, %p133
      %p135 = scmp.ne.s32.totalorder %s126, %s127
      %p136 = scmp.eq.s32.totalorder %s27, 0
      %p137 = por %p135, %p136
      %p138 = scmp.ne.s32.totalorder %s126, %s127
      %p139 = scmp.eq.s32.totalorder %s28, 1
      %p140 = por %p138, %p139
      %p142 = scmp.ne.s32.totalorder %s127, %s141
      %p143 = scmp.eq.s32.totalorder %s28, 0
      %p144 = por %p142, %p143
      %s146 = sadd.s32 %s145, 1
      %p149 = scmp.eq.s32.totalorder %s22, 1
      %p150 = scmp.ne.s32.totalorder %s145, %s147
      %p151 = scmp.eq.s32.totalorder %s22, 0
      %p152 = por %p150, %p151
      %p153 = scmp.ne.s32.totalorder %s145, %s147
      %p154 = scmp.eq.s32.totalorder %s27, 1
      %p155 = por %p153, %p154
      %p156 = scmp.ne.s32.totalorder %s147, %s148
      %p157 = scmp.eq.s32.totalorder %s27, 0
      %p158 = por %p156, %p157
      %p159 = scmp.ne.s32.totalorder %s147, %s148
      %p160 = scmp.eq.s32.totalorder %s28, 1
      %p161 = por %p159, %p160
      %p163 = scmp.ne.s32.totalorder %s148, %s162
      %p164 = scmp.eq.s32.totalorder %s28, 0
      %p165 = por %p163, %p164
      %s167 = sadd.s32 %s166, 1
      %p170 = scmp.eq.s32.totalorder %s22, 1
      %p171 = scmp.ne.s32.totalorder %s166, %s168
      %p172 = scmp.eq.s32.totalorder %s22, 0
      %p173 = por %p171, %p172
      %p174 = scmp.ne.s32.totalorder %s166, %s168
      %p175 = scmp.eq.s32.totalorder %s27, 1
      %p176 = por %p174, %p175
      %p177 = scmp.ne.s32.totalorder %s168, %s169
      %p178 = scmp.eq.s32.totalorder %s27, 0
      %p179 = por %p177, %p178
      %p180 = scmp.ne.s32.totalorder %s168, %s169
      %p181 = scmp.eq.s32.totalorder %s28, 1
      %p182 = por %p180, %p181
      %p184 = scmp.ne.s32.totalorder %s169, %s183
      %p185 = scmp.eq.s32.totalorder %s28, 0
      %p186 = por %p184, %p185
      %s187 = ssub.s32 %s29, %s41
      %p188 = scmp.eq.s32.totalorder %s187, 0
      %s190 = sadd.s32 %s189, 1
      %s191 = scalar_select %p188, %s189, %s190
      %p194 = pneg %p188
      %p195 = scmp.eq.s32.totalorder %s22, 1
      %p196 = por %p194, %p195
      %p197 = scmp.ne.s32.totalorder %s189, %s192
      %p198 = scmp.eq.s32.totalorder %s22, 0
      %p199 = por %p197, %p198
      %p200 = scmp.ne.s32.totalorder %s189, %s192
      %p201 = scmp.eq.s32.totalorder %s27, 1
      %p202 = por %p200, %p201
      %p203 = scmp.ne.s32.totalorder %s192, %s193
      %p204 = scmp.eq.s32.totalorder %s27, 0
      %p205 = por %p203, %p204
      %p206 = scmp.ne.s32.totalorder %s192, %s193
      %p207 = scmp.eq.s32.totalorder %s28, 1
      %p208 = por %p206, %p207
      %p210 = scmp.ne.s32.totalorder %s193, %s209
      %p211 = scmp.eq.s32.totalorder %s28, 0
      %p212 = por %p210, %p211
      %p213 = scmp.le.s32.totalorder 1, %s22
      %p214 = scmp.lt.s32.totalorder %s22, 3
      %p215 = pnand %p213, %p214
      %p216 = pneg %p215
      // Predicated region
      $region9: #{tpu_custom_call.1} parent=5 // pred_check
        _
      $region10: #{tpu_custom_call.1} parent=5 // pred_check_branch
        %218 = sbr.rel (%p215) target = $region12
      $region11: #{tpu_custom_call.1} parent=5 // pred_region
        %s219 = ssub.s32 %s22, 1
        // Predicated region
        $region13: #{tpu_custom_call.1} parent=11 // pred_check
          %p220 = pneg %p137
        $region14: #{tpu_custom_call.1} parent=11 // pred_check_branch
          %222 = sbr.rel (%p220) target = $region16
        $region15: #{tpu_custom_call.1} parent=11 // pred_region
          %224 = vsyncadd [#allocation13], 0
          %s225 = sshll.u32 %s3, 4
          %s226 = int_to_ptr.hbm [resolvable:$true] %s225
          %s227 = sshll.u32 [#allocation12], 4
          %s228 = int_to_ptr.vmem [resolvable:$true] %s227
          %233 = dma.hbm_to_vmem [thread:$0]  %s226, 256, %s228, [#allocation13], 64, 64, 4
        $region16: #{tpu_custom_call.1} parent=11 // pred_fallthru
          _
        // Predicated region
        $region17: #{tpu_custom_call.1} parent=11 // pred_check
          %p234 = pneg %p158
        $region18: #{tpu_custom_call.1} parent=11 // pred_check_branch
          %236 = sbr.rel (%p234) target = $region20
        $region19: #{tpu_custom_call.1} parent=11 // pred_region
          %238 = vsyncadd [#allocation13], 0
          %s239 = sshll.u32 %s4, 4
          %s240 = int_to_ptr.hbm [resolvable:$true] %s239
          %s241 = sshll.u32 [#allocation14], 4
          %s242 = int_to_ptr.vmem [resolvable:$true] %s241
          %247 = dma.hbm_to_vmem [thread:$0]  %s240, 256, %s242, [#allocation13], 64, 64, 4
        $region20: #{tpu_custom_call.1} parent=11 // pred_fallthru
          _
        // Predicated region
        $region21: #{tpu_custom_call.1} parent=11 // pred_check
          %p248 = pneg %p179
        $region22: #{tpu_custom_call.1} parent=11 // pred_check_branch
          %250 = sbr.rel (%p248) target = $region24
        $region23: #{tpu_custom_call.1} parent=11 // pred_region
          _
        $region24: #{tpu_custom_call.1} parent=11 // pred_fallthru
          _
      $region12: #{tpu_custom_call.1} parent=5 // pred_fallthru
        _
      %p251 = scmp.lt.s32.totalorder %s22, 2
      // Predicated region
      $region25: #{tpu_custom_call.1} parent=5 // pred_check
        %p252 = pneg %p251
      $region26: #{tpu_custom_call.1} parent=5 // pred_check_branch
        %254 = sbr.rel (%p252) target = $region28
      $region27: #{tpu_custom_call.1} parent=5 // pred_region
        // Predicated region
        $region29: #{tpu_custom_call.1} parent=27 // pred_check
          %p255 = pneg %p54
        $region30: #{tpu_custom_call.1} parent=27 // pred_check_branch
          %257 = sbr.rel (%p255) target = $region32
        $region31: #{tpu_custom_call.1} parent=27 // pred_region
          %s258 = sand.u32 %s44, 1
          %s259 = scalar_lea.sflag [#allocation7], %s258
          %s260 = sand.u32 %s44, 1
          %s261 = smul.addr %s260, 2
          %s262 = scalar_lea.vmem [#allocation6], %s261
          %264 = vsyncadd %s259, 0
          %s265 = smul.addr %s29, 2
          %s266 = scalar_lea.hbm %s0, %s265
          %s268 = sshll.u32 %s266, 4
          %s269 = int_to_ptr.hbm [resolvable:$true] %s268
          %s270 = sshll.u32 %s262, 4
          %s271 = int_to_ptr.vmem [resolvable:$true] %s270
          %273 = dma.hbm_to_vmem [thread:$0]  %s269, 32, %s271, %s259
        $region32: #{tpu_custom_call.1} parent=27 // pred_fallthru
          _
        // Predicated region
        $region33: #{tpu_custom_call.1} parent=27 // pred_check
          %p274 = pneg %p82
        $region34: #{tpu_custom_call.1} parent=27 // pred_check_branch
          %276 = sbr.rel (%p274) target = $region36
        $region35: #{tpu_custom_call.1} parent=27 // pred_region
          %s277 = sand.u32 %s22, 1
          %s278 = scalar_lea.sflag [#allocation10], %s277
          %s279 = sand.u32 %s72, 1
          %s280 = smul.addr %s279, 8
          %s281 = scalar_lea.vmem [#allocation9], %s280
          %s282 = smul.u32 2, %s30
          %284 = vsyncadd %s278, 0
          %s285 = smul.addr %s29, 2
          %s286 = sadd.s32 %s282, %s285
          %s287 = smul.addr %s286, 4
          %s288 = scalar_lea.hbm %s1, %s287
          %s289 = sshll.u32 %s288, 4
          %s290 = int_to_ptr.hbm [resolvable:$true] %s289
          %s291 = sshll.u32 %s281, 4
          %s292 = int_to_ptr.vmem [resolvable:$true] %s291
          %297 = dma.hbm_to_vmem [thread:$0]  %s290, 128, %s292, %s278, 64, 64, 4
        $region36: #{tpu_custom_call.1} parent=27 // pred_fallthru
          _
        // Predicated region
        $region37: #{tpu_custom_call.1} parent=27 // pred_check
          %p298 = pneg %p110
        $region38: #{tpu_custom_call.1} parent=27 // pred_check_branch
          %300 = sbr.rel (%p298) target = $region40
        $region39: #{tpu_custom_call.1} parent=27 // pred_region
          %s301 = sand.u32 %s22, 1
          %s302 = scalar_lea.sflag [#allocation10], %s301
          %s303 = sand.u32 %s100, 1
          %s304 = scalar_lea.vmem [#allocation11], %s303
          %306 = vsyncadd %s302, 0
          %s307 = sadd.s32 %s30, %s29
          %s308 = scalar_lea.hbm %s2, %s307
          %s310 = sshll.u32 %s308, 4
          %s311 = int_to_ptr.hbm [resolvable:$true] %s310
          %s312 = sshll.u32 %s304, 4
          %s313 = int_to_ptr.vmem [resolvable:$true] %s312
          %315 = dma.hbm_to_vmem [thread:$0]  %s311, 16, %s313, %s302
        $region40: #{tpu_custom_call.1} parent=27 // pred_fallthru
          _
      $region28: #{tpu_custom_call.1} parent=5 // pred_fallthru
        _
      %p316 = scmp.le.s32.totalorder 1, %s22
      %p317 = scmp.lt.s32.totalorder %s22, 3
      %p318 = pnand %p316, %p317
      %p319 = pneg %p318
      // Predicated region
      $region41: #{tpu_custom_call.1} parent=5 // pred_check
        _
      $region42: #{tpu_custom_call.1} parent=5 // pred_check_branch
        %321 = sbr.rel (%p318) target = $region44
      $region43: #{tpu_custom_call.1} parent=5 // pred_region
        %s322 = ssub.s32 %s22, 1
        %s323 = sand.u32 %s47, 1
        %s324 = scalar_lea.sflag [#allocation7], %s323
        %s325 = sand.u32 %s47, 1
        %s326 = smul.addr %s325, 2
        %s327 = scalar_lea.vmem [#allocation6], %s326
        // Predicated region
        $region45: #{tpu_custom_call.1} parent=43 // pred_check
          %p328 = pneg %p60
        $region46: #{tpu_custom_call.1} parent=43 // pred_check_branch
          %330 = sbr.rel (%p328) target = $region48
        $region47: #{tpu_custom_call.1} parent=43 // pred_region
          %332 = dma.done %s324, 32
        $region48: #{tpu_custom_call.1} parent=43 // pred_fallthru
          _
        %s333 = sand.u32 %s27, 1
        %s334 = scalar_lea.sflag [#allocation10], %s333
        %s335 = sand.u32 %s75, 1
        %s336 = smul.addr %s335, 8
        %s337 = scalar_lea.vmem [#allocation9], %s336
        // Predicated region
        $region49: #{tpu_custom_call.1} parent=43 // pred_check
          %p338 = pneg %p88
        $region50: #{tpu_custom_call.1} parent=43 // pred_check_branch
          %340 = sbr.rel (%p338) target = $region52
        $region51: #{tpu_custom_call.1} parent=43 // pred_region
          %342 = dma.done %s334, 128
        $region52: #{tpu_custom_call.1} parent=43 // pred_fallthru
          _
        %s343 = sand.u32 %s27, 1
        %s344 = scalar_lea.sflag [#allocation10], %s343
        %s345 = sand.u32 %s103, 1
        %s346 = scalar_lea.vmem [#allocation11], %s345
        // Predicated region
        $region53: #{tpu_custom_call.1} parent=43 // pred_check
          %p347 = pneg %p116
        $region54: #{tpu_custom_call.1} parent=43 // pred_check_branch
          %349 = sbr.rel (%p347) target = $region56
        $region55: #{tpu_custom_call.1} parent=43 // pred_region
          %351 = dma.done %s344, 16
        $region56: #{tpu_custom_call.1} parent=43 // pred_fallthru
          _
        // Predicated region
        $region57: #{tpu_custom_call.1} parent=43 // pred_check
          %p352 = pneg %p137
        $region58: #{tpu_custom_call.1} parent=43 // pred_check_branch
          %354 = sbr.rel (%p352) target = $region60
        $region59: #{tpu_custom_call.1} parent=43 // pred_region
          %356 = dma.done [#allocation13], 256
        $region60: #{tpu_custom_call.1} parent=43 // pred_fallthru
          _
        // Predicated region
        $region61: #{tpu_custom_call.1} parent=43 // pred_check
          %p357 = pneg %p158
        $region62: #{tpu_custom_call.1} parent=43 // pred_check_branch
          %359 = sbr.rel (%p357) target = $region64
        $region63: #{tpu_custom_call.1} parent=43 // pred_region
          %361 = dma.done [#allocation13], 256
        $region64: #{tpu_custom_call.1} parent=43 // pred_fallthru
          _
        %s362 = sand.u32 %s47, 1
        %s363 = scalar_lea.sflag [#allocation7], %s362
        %s364 = sand.u32 %s47, 1
        %s365 = smul.addr %s364, 2
        %s366 = scalar_lea.vmem [#allocation6], %s365
        %p367 = pneg %p60
        %p368 = pneg %p57
        %s369 = sand.u32 %s27, 1
        %s370 = scalar_lea.sflag [#allocation10], %s369
        %s371 = sand.u32 %s75, 1
        %s372 = smul.addr %s371, 8
        %s373 = scalar_lea.vmem [#allocation9], %s372
        %p374 = pneg %p88
        %p375 = pneg %p85
        %s376 = sand.u32 %s27, 1
        %s377 = scalar_lea.sflag [#allocation10], %s376
        %s378 = sand.u32 %s103, 1
        %s379 = scalar_lea.vmem [#allocation11], %s378
        %p380 = pneg %p116
        %p381 = pneg %p113
        %p382 = pneg %p137
        %p383 = pneg %p134
        %p384 = pneg %p158
        %p385 = pneg %p155
        %p386 = pneg %p179
        %p387 = pneg %p176
        %p388 = pneg %p205
        %p389 = pneg %p202
        %s390 = sand.u32 %s192, 1
        %s391 = scalar_lea.sflag [#allocation8], %s390
        %s392 = sand.u32 %s192, 1
        %s393 = smul.addr %s392, 4
        %s394 = scalar_lea.vmem [#allocation15], %s393
        %s395 = smul.u32 2, %s32
        %p397 = scmp.eq.s32.totalorder %s32, 0
        // Predicated region
        $region65: #{tpu_custom_call.1} parent=43 // pred_check
          %p398 = pneg %p397
        $region66: #{tpu_custom_call.1} parent=43 // pred_check_branch
          %400 = sbr.rel (%p398) target = $region68
        $region67: #{tpu_custom_call.1} parent=43 // pred_region
          %vm401 = vcmask 3072
          %402 = vst.msk [vmem:[#allocation4] sm:$0xf] %vm401, -1e+30
          %403 = vst.msk [vmem:[#allocation4 + $0x4] sm:$0xf] %vm401, -1e+30
          %404 = vst.msk [vmem:[#allocation4 + $0x8] sm:$0xf] %vm401, -1e+30
          %405 = vst.msk [vmem:[#allocation4 + $0xc] sm:$0xf] %vm401, -1e+30
          %406 = vst.msk [vmem:[#allocation5] sm:$0xf] %vm401, 0.0
          %407 = vst.msk [vmem:[#allocation5 + $0x4] sm:$0xf] %vm401, 0.0
          %408 = vst.msk [vmem:[#allocation5 + $0x8] sm:$0xf] %vm401, 0.0
          %409 = vst.msk [vmem:[#allocation5 + $0xc] sm:$0xf] %vm401, 0.0
          %vm410 = vcmask 257024
          %411 = vst.msk [vmem:[#allocation3] sm:$0xf] %vm410, 0.0
        $region68: #{tpu_custom_call.1} parent=43 // pred_fallthru
          _
        %v412 = vld [vmem:[%s337] sm:$0xf]
        %v413 = vld [vmem:[%s337 + $0x4] sm:$0xf]
        %v414 = vld [vmem:[#allocation12] sm:$0xf]
        %v415 = vld [vmem:[#allocation12 + $0x4] sm:$0xf]
        %v416 = vld [vmem:[#allocation12 + $0x8] sm:$0xf]
        %v417 = vld [vmem:[#allocation12 + $0xc] sm:$0xf]
        %v420 = vunpack.c.l.b16 %v412
        %v421 = vunpack.c.l.b16 %v413
        %v422 = vpack.c.b16 %v421, %v420
        %v427 = vunpack.c.l.b16 %v414
        %v428 = vunpack.c.l.b16 %v415
        %v429 = vunpack.c.l.b16 %v416
        %v430 = vunpack.c.l.b16 %v417
        %v431 = vpack.c.b16 %v428, %v427
        %v432 = vpack.c.b16 %v430, %v429
        %vm435 = vcmask 261120
        %v437 = vsel %vm435, %v422, 0
        %439 = vmatpush.bf16.msra.mxu0 0
        %440 = vmatpush.bf16.msra.mxu0 0
        %441 = vmatpush.bf16.msra.mxu0 0
        %442 = vmatpush.bf16.msra.mxu0 0
        %443 = vmatpush.bf16.msra.mxu0 0
        %444 = vmatpush.bf16.msra.mxu0 0
        %445 = vmatpush.bf16.msra.mxu0 %v432
        %446 = vmatpush.bf16.msra.mxu0 %v431
        %447 = vmatmul.bf16.gmra.mxu0 %v437
        %v448 = vpop.f32.mrf.mxu0
        %v449 = vadd.f32 0.0, %v448
        %v450 = vpop.f32.mrf.mxu0
        %v451 = vadd.f32 0.0, %v450
        %452 = vdwg.mxu0
        %v453 = vpack.c.bf16 %v449, %v449
        %v454 = vpack.c.bf16 %v451, %v451
        %vm455 = vcmask 519168
        %456 = vst.msk [vmem:[#allocation2] sm:$0xf] %vm455, %v453
        %457 = vst.msk [vmem:[#allocation2 + $0x4] sm:$0xf] %vm455, %v454
        %v458 = vld [vmem:[%s327] sm:$0x3]
        %v459 = vld [vmem:[#allocation2] sm:$0xf]
        %v460 = vld [vmem:[#allocation2 + $0x4] sm:$0xf]
        %v461 = vld [vmem:[%s346] sm:$0x1]
        %vm462 = vcmp.eq.f32.partialorder %v461, 0.0
        %v463 = vsel %vm462, -1e+30, 0.0
        %v464 = vld [vmem:[#allocation3] sm:$0xf]
        %v466 = vperm.slane %v463, 0
        %v470 = vunpack.c.l.b16 %v459
        %v471 = vunpack.c.l.b16 %v460
        %v472 = vpack.c.b16 %v471, %v470
        %vm473 = vcmask 64512
        %v475 = vsel %vm473, %v458, 0
        %v478 = vsel %vm473, %v472, 0
        %480 = vmatpush.bf16.xpose.msra.mxu0 0
        %481 = vmatpush.bf16.xpose.msra.mxu0 0
        %482 = vmatpush.bf16.xpose.msra.mxu0 0
        %483 = vmatpush.bf16.xpose.msra.mxu0 0
        %484 = vmatpush.bf16.xpose.msra.mxu0 0
        %485 = vmatpush.bf16.xpose.msra.mxu0 0
        %486 = vmatpush.bf16.xpose.msra.mxu0 0
        %487 = vmatpush.bf16.xpose.msra.mxu0 %v478
        %488 = vmatmul.bf16.gmra.mxu0 %v475
        %v489 = vpop.f32.mrf.mxu0
        %v490 = vadd.f32 %v466, %v489
        %v491 = vpop.f32.mrf.mxu0
        %492 = vdwg.mxu0
        %v493 = vld [vmem:[#allocation4] sm:$0xf]
        %vm494 = vcmask 125952
        %v495 = vsel %vm494, %v490, -inf
        %496 = vmax.xlane.f32.xlu0 %v495
        %v497 = vpop.xlane.xlu0 %496
        %v498 = vmax.f32 %v493, %v497
        %v499 = vsub.f32 %v493, %v498
        %v500 = vmul.f32 %v499, 1.442695
        %v501 = vpow.pop %v500
        %503 = vset.pattern.permute.xlu0 0
        %504 = vperm.xlu0 %503, %v498
        %v505 = vpop.permute.xlu0 %504
        %v507 = vsub.f32 %v490, %v505
        %v508 = vmul.f32 %v507, 1.442695
        %v509 = vpow.pop %v508
        %v510 = vld [vmem:[#allocation5] sm:$0xf]
        %v511 = vmul.f32 %v501, %v510
        %v512 = vsel %vm494, %v509, 0.0
        %513 = vadd.xlane.f32.xlu0 %v512
        %v514 = vpop.xlane.xlu0 %513
        %v515 = vadd.f32 %v511, %v514
        %vm516 = vcmask 3072
        %517 = vst.msk [vmem:[#allocation5] sm:$0xf] %vm516, %v515
        %518 = vst.msk [vmem:[#allocation4] sm:$0xf] %vm516, %v498
        %v519 = vpack.c.bf16 %v509, %v509
        %520 = vrot.lane.b32.xlu0 %v472, 96
        %v521 = vpop.permute.xlu0 %520
        %vm523 = vcmask 130048
        %v525 = vsel %vm523, %v519, 0
        %527 = vmatpush.bf16.msra.mxu0 0
        %528 = vmatpush.bf16.msra.mxu0 0
        %529 = vmatpush.bf16.msra.mxu0 0
        %530 = vmatpush.bf16.msra.mxu0 0
        %531 = vmatpush.bf16.msra.mxu0 0
        %532 = vmatpush.bf16.msra.mxu0 0
        %533 = vmatpush.bf16.msra.mxu0 0
        %534 = vmatpush.bf16.msra.mxu0 %v521
        %535 = vmatmul.bf16.gmra.mxu0 %v525
        %v536 = vpop.f32.mrf.mxu0
        %v537 = vadd.f32 0.0, %v536
        %v538 = vpop.f32.mrf.mxu0
        %539 = vdwg.mxu0
        %541 = vset.pattern.permute.xlu0 0
        %542 = vperm.xlu0 %541, %v501
        %v543 = vpop.permute.xlu0 %542
        %545 = vst [vmem:[#allocation1] ss:$4 sm:$0xff] %v458
        %v546 = vld.sshfl [vmem:[#allocation1] sm:$0xff pattern:$0x73625140]
        %548 = vrot.lane.b32.xlu0 %v546, 120
        %v549 = vpop.permute.xlu0 %548
        %550 = vrot.lane.b32.xlu0 %v472, 120
        %v551 = vpop.permute.xlu0 %550
        %v553 = vsel %vm473, %v549, 0
        %v556 = vsel %vm473, %v551, 0
        %558 = vmatpush.bf16.xpose.msra.mxu0 0
        %559 = vmatpush.bf16.xpose.msra.mxu0 0
        %560 = vmatpush.bf16.xpose.msra.mxu0 0
        %561 = vmatpush.bf16.xpose.msra.mxu0 0
        %562 = vmatpush.bf16.xpose.msra.mxu0 0
        %563 = vmatpush.bf16.xpose.msra.mxu0 0
        %564 = vmatpush.bf16.xpose.msra.mxu0 0
        %565 = vmatpush.bf16.xpose.msra.mxu0 %v556
        %566 = vmatmul.bf16.gmra.mxu0 %v553
        %v567 = vpop.f32.mrf.mxu0
        %v568 = vadd.f32 %v466, %v567
        %v569 = vpop.f32.mrf.mxu0
        %570 = vdwg.mxu0
        %s571 = scalar_lea.vmem [#allocation4], 4
        %v572 = vld [vmem:[%s571] sm:$0xf]
        %v573 = vsel %vm494, %v568, -inf
        %574 = vmax.xlane.f32.xlu0 %v573
        %v575 = vpop.xlane.xlu0 %574
        %v576 = vmax.f32 %v572, %v575
        %v577 = vsub.f32 %v572, %v576
        %v578 = vmul.f32 %v577, 1.442695
        %v579 = vpow.pop %v578
        %581 = vset.pattern.permute.xlu0 0
        %582 = vperm.xlu0 %581, %v576
        %v583 = vpop.permute.xlu0 %582
        %v585 = vsub.f32 %v568, %v583
        %v586 = vmul.f32 %v585, 1.442695
        %v587 = vpow.pop %v586
        %s588 = scalar_lea.vmem [#allocation5], 4
        %v589 = vld [vmem:[%s588] sm:$0xf]
        %v590 = vmul.f32 %v579, %v589
        %v591 = vsel %vm494, %v587, 0.0
        %592 = vadd.xlane.f32.xlu0 %v591
        %v593 = vpop.xlane.xlu0 %592
        %v594 = vadd.f32 %v590, %v593
        %595 = vst.msk [vmem:[%s588] sm:$0xf] %vm516, %v594
        %596 = vst.msk [vmem:[%s571] sm:$0xf] %vm516, %v576
        %v597 = vpack.c.bf16 %v587, %v587
        %598 = vrot.lane.b32.xlu0 %v472, 88
        %v599 = vpop.permute.xlu0 %598
        %v602 = vsel %vm523, %v597, 0
        %604 = vmatpush.bf16.msra.mxu0 0
        %605 = vmatpush.bf16.msra.mxu0 0
        %606 = vmatpush.bf16.msra.mxu0 0
        %607 = vmatpush.bf16.msra.mxu0 0
        %608 = vmatpush.bf16.msra.mxu0 0
        %609 = vmatpush.bf16.msra.mxu0 0
        %610 = vmatpush.bf16.msra.mxu0 0
        %611 = vmatpush.bf16.msra.mxu0 %v599
        %612 = vmatmul.bf16.gmra.mxu0 %v602
        %v613 = vpop.f32.mrf.mxu0
        %v614 = vadd.f32 0.0, %v613
        %v615 = vpop.f32.mrf.mxu0
        %616 = vdwg.mxu0
        %618 = vset.pattern.permute.xlu0 0
        %619 = vperm.xlu0 %618, %v579
        %v620 = vpop.permute.xlu0 %619
        %622 = vst [vmem:[#allocation1] ss:$4 sm:$0xff] %v458
        %v623 = vld.sshfl [vmem:[#allocation1] sm:$0xff pattern:$0x73625140]
        %625 = vrot.lane.b32.xlu0 %v623, 112
        %v626 = vpop.permute.xlu0 %625
        %627 = vrot.lane.b32.xlu0 %v472, 112
        %v628 = vpop.permute.xlu0 %627
        %v630 = vsel %vm473, %v626, 0
        %v633 = vsel %vm473, %v628, 0
        %635 = vmatpush.bf16.xpose.msra.mxu0 0
        %636 = vmatpush.bf16.xpose.msra.mxu0 0
        %637 = vmatpush.bf16.xpose.msra.mxu0 0
        %638 = vmatpush.bf16.xpose.msra.mxu0 0
        %639 = vmatpush.bf16.xpose.msra.mxu0 0
        %640 = vmatpush.bf16.xpose.msra.mxu0 0
        %641 = vmatpush.bf16.xpose.msra.mxu0 0
        %642 = vmatpush.bf16.xpose.msra.mxu0 %v633
        %643 = vmatmul.bf16.gmra.mxu0 %v630
        %v644 = vpop.f32.mrf.mxu0
        %v645 = vadd.f32 %v466, %v644
        %v646 = vpop.f32.mrf.mxu0
        %647 = vdwg.mxu0
        %s648 = scalar_lea.vmem [#allocation4], 8
        %v649 = vld [vmem:[%s648] sm:$0xf]
        %v650 = vsel %vm494, %v645, -inf
        %651 = vmax.xlane.f32.xlu0 %v650
        %v652 = vpop.xlane.xlu0 %651
        %v653 = vmax.f32 %v649, %v652
        %v654 = vsub.f32 %v649, %v653
        %v655 = vmul.f32 %v654, 1.442695
        %v656 = vpow.pop %v655
        %658 = vset.pattern.permute.xlu0 0
        %659 = vperm.xlu0 %658, %v653
        %v660 = vpop.permute.xlu0 %659
        %v662 = vsub.f32 %v645, %v660
        %v663 = vmul.f32 %v662, 1.442695
        %v664 = vpow.pop %v663
        %s665 = scalar_lea.vmem [#allocation5], 8
        %v666 = vld [vmem:[%s665] sm:$0xf]
        %v667 = vmul.f32 %v656, %v666
        %v668 = vsel %vm494, %v664, 0.0
        %669 = vadd.xlane.f32.xlu0 %v668
        %v670 = vpop.xlane.xlu0 %669
        %v671 = vadd.f32 %v667, %v670
        %672 = vst.msk [vmem:[%s665] sm:$0xf] %vm516, %v671
        %673 = vst.msk [vmem:[%s648] sm:$0xf] %vm516, %v653
        %v674 = vpack.c.bf16 %v664, %v664
        %675 = vrot.lane.b32.xlu0 %v472, 80
        %v676 = vpop.permute.xlu0 %675
        %v679 = vsel %vm523, %v674, 0
        %681 = vmatpush.bf16.msra.mxu0 0
        %682 = vmatpush.bf16.msra.mxu0 0
        %683 = vmatpush.bf16.msra.mxu0 0
        %684 = vmatpush.bf16.msra.mxu0 0
        %685 = vmatpush.bf16.msra.mxu0 0
        %686 = vmatpush.bf16.msra.mxu0 0
        %687 = vmatpush.bf16.msra.mxu0 0
        %688 = vmatpush.bf16.msra.mxu0 %v676
        %689 = vmatmul.bf16.gmra.mxu0 %v679
        %v690 = vpop.f32.mrf.mxu0
        %v691 = vadd.f32 0.0, %v690
        %v692 = vpop.f32.mrf.mxu0
        %693 = vdwg.mxu0
        %695 = vset.pattern.permute.xlu0 0
        %696 = vperm.xlu0 %695, %v656
        %v697 = vpop.permute.xlu0 %696
        %699 = vst [vmem:[#allocation1] ss:$4 sm:$0xff] %v458
        %v700 = vld.sshfl [vmem:[#allocation1] sm:$0xff pattern:$0x73625140]
        %702 = vrot.lane.b32.xlu0 %v700, 104
        %v703 = vpop.permute.xlu0 %702
        %704 = vrot.lane.b32.xlu0 %v472, 104
        %v705 = vpop.permute.xlu0 %704
        %v707 = vsel %vm473, %v703, 0
        %v710 = vsel %vm473, %v705, 0
        %712 = vmatpush.bf16.xpose.msra.mxu0 0
        %713 = vmatpush.bf16.xpose.msra.mxu0 0
        %714 = vmatpush.bf16.xpose.msra.mxu0 0
        %715 = vmatpush.bf16.xpose.msra.mxu0 0
        %716 = vmatpush.bf16.xpose.msra.mxu0 0
        %717 = vmatpush.bf16.xpose.msra.mxu0 0
        %718 = vmatpush.bf16.xpose.msra.mxu0 0
        %719 = vmatpush.bf16.xpose.msra.mxu0 %v710
        %720 = vmatmul.bf16.gmra.mxu0 %v707
        %v721 = vpop.f32.mrf.mxu0
        %v722 = vadd.f32 %v466, %v721
        %v723 = vpop.f32.mrf.mxu0
        %724 = vdwg.mxu0
        %s725 = scalar_lea.vmem [#allocation4], 12
        %v726 = vld [vmem:[%s725] sm:$0xf]
        %v727 = vsel %vm494, %v722, -inf
        %728 = vmax.xlane.f32.xlu0 %v727
        %v729 = vpop.xlane.xlu0 %728
        %v730 = vmax.f32 %v726, %v729
        %v731 = vsub.f32 %v726, %v730
        %v732 = vmul.f32 %v731, 1.442695
        %v733 = vpow.pop %v732
        %735 = vset.pattern.permute.xlu0 0
        %736 = vperm.xlu0 %735, %v730
        %v737 = vpop.permute.xlu0 %736
        %v739 = vsub.f32 %v722, %v737
        %v740 = vmul.f32 %v739, 1.442695
        %v741 = vpow.pop %v740
        %s742 = scalar_lea.vmem [#allocation5], 12
        %v743 = vld [vmem:[%s742] sm:$0xf]
        %v744 = vmul.f32 %v733, %v743
        %v745 = vsel %vm494, %v741, 0.0
        %746 = vadd.xlane.f32.xlu0 %v745
        %v747 = vpop.xlane.xlu0 %746
        %v748 = vadd.f32 %v744, %v747
        %749 = vst.msk [vmem:[%s742] sm:$0xf] %vm516, %v748
        %750 = vst.msk [vmem:[%s725] sm:$0xf] %vm516, %v730
        %v751 = vpack.c.bf16 %v741, %v741
        %752 = vrot.lane.b32.xlu0 %v472, 72
        %v753 = vpop.permute.xlu0 %752
        %v756 = vsel %vm523, %v751, 0
        %758 = vmatpush.bf16.msra.mxu0 0
        %759 = vmatpush.bf16.msra.mxu0 0
        %760 = vmatpush.bf16.msra.mxu0 0
        %761 = vmatpush.bf16.msra.mxu0 0
        %762 = vmatpush.bf16.msra.mxu0 0
        %763 = vmatpush.bf16.msra.mxu0 0
        %764 = vmatpush.bf16.msra.mxu0 0
        %765 = vmatpush.bf16.msra.mxu0 %v753
        %766 = vmatmul.bf16.gmra.mxu0 %v756
        %v767 = vpop.f32.mrf.mxu0
        %v768 = vadd.f32 0.0, %v767
        %v769 = vpop.f32.mrf.mxu0
        %770 = vdwg.mxu0
        %772 = vset.pattern.permute.xlu0 0
        %773 = vperm.xlu0 %772, %v733
        %v774 = vpop.permute.xlu0 %773
        %v776 = vsel %vm473, %v543, %v620
        %v777 = vsel %vm523, %v776, %v697
        %vm778 = vcmask 195584
        %v779 = vsel %vm778, %v777, %v774
        %v780 = vmul.f32 %v779, %v464
        %782 = vrot.lane.b32.xlu0 %v614, 8
        %v783 = vpop.permute.xlu0 %782
        %786 = vrot.lane.b32.xlu0 %v691, 16
        %v787 = vpop.permute.xlu0 %786
        %790 = vrot.lane.b32.xlu0 %v768, 24
        %v791 = vpop.permute.xlu0 %790
        %v793 = vsel %vm473, %v537, %v783
        %v794 = vsel %vm523, %v793, %v787
        %v795 = vsel %vm778, %v794, %v791
        %v796 = vadd.f32 %v780, %v795
        %vm797 = vcmask 257024
        %798 = vst.msk [vmem:[#allocation3] sm:$0xf] %vm797, %v796
        // Predicated region
        $region69: #{tpu_custom_call.1} parent=43 // pred_check
          %p799 = pneg %p397
        $region70: #{tpu_custom_call.1} parent=43 // pred_check_branch
          %801 = sbr.rel (%p799) target = $region72
        $region71: #{tpu_custom_call.1} parent=43 // pred_region
          %v802 = vld [vmem:[#allocation3] sm:$0xf]
          %v803 = vld [vmem:[#allocation5] sm:$0xf]
          %v804 = vrcp.pop %v803
          %806 = vset.pattern.permute.xlu0 0
          %807 = vperm.xlu0 %806, %v804
          %v808 = vpop.permute.xlu0 %807
          %v810 = vmul.f32 %v802, %v808
          %v811 = vpack.c.bf16 %v810, %v810
          %v812 = vld [vmem:[%s588] sm:$0xf]
          %v813 = vrcp.pop %v812
          %815 = vset.pattern.permute.xlu0 0
          %816 = vperm.xlu0 %815, %v813
          %v817 = vpop.permute.xlu0 %816
          %v819 = vmul.f32 %v802, %v817
          %v820 = vpack.c.bf16 %v819, %v819
          %v821 = vld [vmem:[%s665] sm:$0xf]
          %v822 = vrcp.pop %v821
          %824 = vset.pattern.permute.xlu0 0
          %825 = vperm.xlu0 %824, %v822
          %v826 = vpop.permute.xlu0 %825
          %v828 = vmul.f32 %v802, %v826
          %v829 = vpack.c.bf16 %v828, %v828
          %v830 = vld [vmem:[%s742] sm:$0xf]
          %v831 = vrcp.pop %v830
          %833 = vset.pattern.permute.xlu0 0
          %834 = vperm.xlu0 %833, %v831
          %v835 = vpop.permute.xlu0 %834
          %v837 = vmul.f32 %v802, %v835
          %v838 = vpack.c.bf16 %v837, %v837
          %v841 = vsel %vm473, %v811, %v820
          %v843 = vsel %vm523, %v841, %v829
          %v845 = vsel %vm778, %v843, %v838
          %v846 = vld [vmem:[#allocation14] sm:$0xf]
          %v847 = vld [vmem:[#allocation14 + $0x4] sm:$0xf]
          %v848 = vld [vmem:[#allocation14 + $0x8] sm:$0xf]
          %v849 = vld [vmem:[#allocation14 + $0xc] sm:$0xf]
          %v850 = vld [vmem:[%s5] sm:$0x1]
          %v852 = vperm.slane %v850, 0
          %v858 = vunpack.c.l.b16 %v846
          %v859 = vunpack.c.l.b16 %v847
          %v860 = vunpack.c.l.b16 %v848
          %v861 = vunpack.c.l.b16 %v849
          %v862 = vpack.c.b16 %v859, %v858
          %v863 = vpack.c.b16 %v861, %v860
          %v866 = vsel %vm435, %v845, 0
          %868 = vmatpush.bf16.msra.mxu0 0
          %869 = vmatpush.bf16.msra.mxu0 0
          %870 = vmatpush.bf16.msra.mxu0 0
          %871 = vmatpush.bf16.msra.mxu0 0
          %872 = vmatpush.bf16.msra.mxu0 0
          %873 = vmatpush.bf16.msra.mxu0 0
          %874 = vmatpush.bf16.msra.mxu0 %v863
          %875 = vmatpush.bf16.msra.mxu0 %v862
          %876 = vmatmul.bf16.gmra.mxu0 %v866
          %v877 = vpop.f32.mrf.mxu0
          %v878 = vadd.f32 %v852, %v877
          %v879 = vpop.f32.mrf.mxu0
          %880 = vdwg.mxu0
          %881 = vst.msk [vmem:[%s394] sm:$0xf] %vm797, %v878
        $region72: #{tpu_custom_call.1} parent=43 // pred_fallthru
          _
        %s882 = sand.u32 %s192, 1
        %s883 = scalar_lea.sflag [#allocation8], %s882
        %s884 = sand.u32 %s192, 1
        %s885 = smul.addr %s884, 4
        %s886 = scalar_lea.vmem [#allocation15], %s885
        // Predicated region
        $region73: #{tpu_custom_call.1} parent=43 // pred_check
          %p887 = pneg %p202
        $region74: #{tpu_custom_call.1} parent=43 // pred_check_branch
          %889 = sbr.rel (%p887) target = $region76
        $region75: #{tpu_custom_call.1} parent=43 // pred_region
          %891 = vsyncadd %s883, 0
          %s892 = smul.addr %s31, 4
          %s893 = scalar_lea.hbm %s6, %s892
          %s895 = sshll.u32 %s886, 4
          %s896 = int_to_ptr.vmem [resolvable:$true] %s895
          %s897 = sshll.u32 %s893, 4
          %s898 = int_to_ptr.hbm [resolvable:$true] %s897
          %900 = dma.vmem_to_hbm [thread:$0]  %s896, 64, %s898, %s883
        $region76: #{tpu_custom_call.1} parent=43 // pred_fallthru
          _
      $region44: #{tpu_custom_call.1} parent=5 // pred_fallthru
        _
      %p901 = scmp.le.s32.totalorder 2, %s22
      // Predicated region
      $region77: #{tpu_custom_call.1} parent=5 // pred_check
        %p902 = pneg %p901
      $region78: #{tpu_custom_call.1} parent=5 // pred_check_branch
        %904 = sbr.rel (%p902) target = $region80
      $region79: #{tpu_custom_call.1} parent=5 // pred_region
        %s905 = ssub.s32 %s22, 2
        // Predicated region
        $region81: #{tpu_custom_call.1} parent=79 // pred_check
          %p906 = pneg %p208
        $region82: #{tpu_custom_call.1} parent=79 // pred_check_branch
          %908 = sbr.rel (%p906) target = $region84
        $region83: #{tpu_custom_call.1} parent=79 // pred_region
          %s909 = sand.u32 %s193, 1
          %s910 = scalar_lea.sflag [#allocation8], %s909
          %s911 = sand.u32 %s193, 1
          %s912 = smul.addr %s911, 4
          %s913 = scalar_lea.vmem [#allocation15], %s912
          %915 = dma.done %s910, 64
        $region84: #{tpu_custom_call.1} parent=79 // pred_fallthru
          _
      $region80: #{tpu_custom_call.1} parent=5 // pred_fallthru
        _
    $region6: #{tpu_custom_call.1} parent=1 // loop_footer
      %s26 = sadd.s32 1, %s22
    $region7: #{tpu_custom_call.1} parent=1 // loop_footer_branch
      %21 = sbr.rel target = $region3
    $region8: #{tpu_custom_call.1} parent=1 // loop_exit
      _
    %916 = vsyncpa [#allocation7], 1
    %s917 = scalar_lea.sflag [#allocation7], 1
    %918 = vsyncpa %s917, 1
    %919 = vsyncpa [#allocation10], 1
    %s920 = scalar_lea.sflag [#allocation10], 1
    %921 = vsyncpa %s920, 1
    %922 = vsyncpa [#allocation13], 1
    %923 = vsyncpa [#allocation8], 1
    %s924 = scalar_lea.sflag [#allocation8], 1
    %925 = vsyncpa %s924, 1

// kernel: tpu_custom_call.1
$region0: #{tpu_custom_call.1}
  #allocation0 [shape = 'u32[]', space=smem, size = 0x4, offset = 0x4, fixed_abs, tag = 'smem constant byte address 0x4 - core index']
  #allocation1 [shape = 'u32[72,128]{1,0:T(1,128)}', space=vmem, size = 0x9000, scoped, tag = 'internal scratch']
  #allocation2 [shape = 'bf16[16,64]{1,0:T(8,128)(2,1)}', space=vmem, size = 0x1000, scoped, tag = 'scratch operand']
  #allocation3 [shape = 'f32[4,32]{1,0:T(4,128)}', space=vmem, size = 0x800, scoped, tag = 'scratch operand']
  #allocation4 [shape = 'f32[4,4,1]{2,1,0:T(4,128)}', space=vmem, size = 0x2000, scoped, tag = 'scratch operand']
  #allocation5 [shape = 'f32[4,4,1]{2,1,0:T(4,128)}', space=vmem, size = 0x2000, scoped, tag = 'scratch operand']
  %s0 = inlined_call_operand.hbm [shape: bf16[2,4,32], index: 0, kind: input, shape index: {}]
  %s1 = inlined_call_operand.hbm [shape: bf16[2,16,32], index: 1, kind: input, shape index: {}]
  %s2 = inlined_call_operand.hbm [shape: f32[2,1,16], index: 2, kind: input, shape index: {}]
  %s3 = inlined_call_operand.hbm [shape: bf16[32,64], index: 3, kind: input, shape index: {}]
  %s4 = inlined_call_operand.hbm [shape: bf16[32,32], index: 4, kind: input, shape index: {}]
  %s5 = inlined_call_operand.vmem [shape: f32[1,32], index: 5, kind: input, shape index: {}]
  %s6 = inlined_call_operand.hbm [shape: f32[2,4,32], index: 6, kind: output, shape index: {}]
  %s7 = sld [smem:[#allocation0]]
  $region85: #{tpu_custom_call.1} parent=0
    _
  %s9 = ssub.s32 1, %s7
  %s10 = scalar_select 0, %s9, %s7
  $region1: #{tpu_custom_call.1} parent=0
    #allocation6 [shape = 'u8[2048]{0}', space=vmem, size = 0x800, scoped, tag = 'input window, operand 0']
    #allocation7 [shape = 's32[2]{0}', space=sflag, size = 0x8, scoped, tag = 'scoped memory for tpu_custom_call.1']
    #allocation8 [shape = 's32[2]{0}', space=sflag, size = 0x8, scoped, tag = 'scoped memory for tpu_custom_call.1']
    #allocation9 [shape = 'u8[8192]{0}', space=vmem, size = 0x2000, scoped, tag = 'input window, operand 1']
    #allocation10 [shape = 's32[2]{0}', space=sflag, size = 0x8, scoped, tag = 'scoped memory for tpu_custom_call.1']
    #allocation11 [shape = 'u8[1024]{0}', space=vmem, size = 0x400, scoped, tag = 'input window, operand 2']
    #allocation12 [shape = 'u8[8192]{0}', space=vmem, size = 0x2000, scoped, tag = 'input window, operand 3, single buffered']
    #allocation13 [shape = 's32[1]{0}', space=sflag, size = 0x4, scoped, tag = 'scoped memory for tpu_custom_call.1']
    #allocation14 [shape = 'u8[8192]{0}', space=vmem, size = 0x2000, scoped, tag = 'input window, operand 4, single buffered']
    #allocation15 [shape = 'u8[4096]{0}', space=vmem, size = 0x1000, scoped, tag = 'output window, operand 0']
    %11 = vsyncpa [#allocation7], 0
    %s12 = scalar_lea.sflag [#allocation7], 1
    %13 = vsyncpa %s12, 0
    %14 = vsyncpa [#allocation10], 0
    %s15 = scalar_lea.sflag [#allocation10], 1
    %16 = vsyncpa %s15, 0
    %17 = vsyncpa [#allocation13], 0
    %18 = vsyncpa [#allocation8], 0
    %s19 = scalar_lea.sflag [#allocation8], 1
    %20 = vsyncpa %s19, 0
    loop: start=0, step=1, limit=4
    $region2: #{tpu_custom_call.1} parent=1 // loop_pre_header
      _
    $region3: #{tpu_custom_call.1} parent=1 // loop_header
      %s22 = sphi 0, %s26
      %p23 = scmp.ge.s32.totalorder %s22, 4
      %s29 = sphi 0, %s41
      %s30 = sphi 0, %s37
      %s31 = sphi 0, %s29
      %s32 = sphi 0, %s30
      %s33 = sphi 0, %s31
      %s34 = sphi 0, %s32
      %s44 = sphi 0, %s46
      %s47 = sphi 0, %s44
      %s48 = sphi 0, %s47
      %s64 = sphi 0, %s48
      %s72 = sphi 0, %s74
      %s75 = sphi 0, %s72
      %s76 = sphi 0, %s75
      %s92 = sphi 0, %s76
      %s100 = sphi 0, %s102
      %s103 = sphi 0, %s100
      %s104 = sphi 0, %s103
      %s120 = sphi 0, %s104
      %s124 = sphi 0, %s124
      %s126 = sphi 0, %s124
      %s127 = sphi 0, %s126
      %s141 = sphi 0, %s127
      %s145 = sphi 0, %s145
      %s147 = sphi 0, %s145
      %s148 = sphi 0, %s147
      %s162 = sphi 0, %s148
      %s166 = sphi 0, %s166
      %s168 = sphi 0, %s166
      %s169 = sphi 0, %s168
      %s183 = sphi 0, %s169
      %s189 = sphi 0, %s191
      %s192 = sphi 0, %s189
      %s193 = sphi 0, %s192
      %s209 = sphi 0, %s193
    $region4: #{tpu_custom_call.1} parent=1 // loop_header_branch
      %25 = sbr.rel (%p23) target = $region8
    $region5: #{tpu_custom_call.1} parent=1 // loop_body
      %s27 = ssub.s32 %s22, 1
      %s28 = ssub.s32 %s22, 2
      %s35 = sadd.s32 1, %s30
      %p36 = scmp.ge.s32.totalorder %s35, 1
      %s37 = scalar_select %p36, 0, %s35
      %s38 = sadd.s32 1, %s29
      %s39 = scalar_select %p36, %s38, %s29
      %p40 = scmp.ge.s32.totalorder %s39, 2
      %s41 = scalar_select %p40, 0, %s39
      %s42 = ssub.s32 %s29, %s41
      %p43 = scmp.eq.s32.totalorder %s42, 0
      %s45 = sadd.s32 %s44, 1
      %s46 = scalar_select %p43, %s44, %s45
      %p49 = pneg %p43
      %p50 = scmp.eq.s32.totalorder %s22, 1
      %p51 = por %p49, %p50
      %p52 = scmp.ne.s32.totalorder %s44, %s47
      %p53 = scmp.eq.s32.totalorder %s22, 0
      %p54 = por %p52, %p53
      %p55 = scmp.ne.s32.totalorder %s44, %s47
      %p56 = scmp.eq.s32.totalorder %s27, 1
      %p57 = por %p55, %p56
      %p58 = scmp.ne.s32.totalorder %s47, %s48
      %p59 = scmp.eq.s32.totalorder %s27, 0
      %p60 = por %p58, %p59
      %p61 = scmp.ne.s32.totalorder %s47, %s48
      %p62 = scmp.eq.s32.totalorder %s28, 1
      %p63 = por %p61, %p62
      %p65 = scmp.ne.s32.totalorder %s48, %s64
      %p66 = scmp.eq.s32.totalorder %s28, 0
      %p67 = por %p65, %p66
      %s68 = ssub.s32 %s29, %s41
      %s69 = ssub.s32 %s30, %s37
      %s70 = sor.u32 %s68, %s69
      %p71 = scmp.eq.s32.totalorder %s70, 0
      %s73 = sadd.s32 %s72, 1
      %s74 = scalar_select %p71, %s72, %s73
      %p77 = pneg %p71
      %p78 = scmp.eq.s32.totalorder %s22, 1
      %p79 = por %p77, %p78
      %p80 = scmp.ne.s32.totalorder %s72, %s75
      %p81 = scmp.eq.s32.totalorder %s22, 0
      %p82 = por %p80, %p81
      %p83 = scmp.ne.s32.totalorder %s72, %s75
      %p84 = scmp.eq.s32.totalorder %s27, 1
      %p85 = por %p83, %p84
      %p86 = scmp.ne.s32.totalorder %s75, %s76
      %p87 = scmp.eq.s32.totalorder %s27, 0
      %p88 = por %p86, %p87
      %p89 = scmp.ne.s32.totalorder %s75, %s76
      %p90 = scmp.eq.s32.totalorder %s28, 1
      %p91 = por %p89, %p90
      %p93 = scmp.ne.s32.totalorder %s76, %s92
      %p94 = scmp.eq.s32.totalorder %s28, 0
      %p95 = por %p93, %p94
      %s96 = ssub.s32 %s29, %s41
      %s97 = ssub.s32 %s30, %s37
      %s98 = sor.u32 %s96, %s97
      %p99 = scmp.eq.s32.totalorder %s98, 0
      %s101 = sadd.s32 %s100, 1
      %s102 = scalar_select %p99, %s100, %s101
      %p105 = pneg %p99
      %p106 = scmp.eq.s32.totalorder %s22, 1
      %p107 = por %p105, %p106
      %p108 = scmp.ne.s32.totalorder %s100, %s103
      %p109 = scmp.eq.s32.totalorder %s22, 0
      %p110 = por %p108, %p109
      %p111 = scmp.ne.s32.totalorder %s100, %s103
      %p112 = scmp.eq.s32.totalorder %s27, 1
      %p113 = por %p111, %p112
      %p114 = scmp.ne.s32.totalorder %s103, %s104
      %p115 = scmp.eq.s32.totalorder %s27, 0
      %p116 = por %p114, %p115
      %p117 = scmp.ne.s32.totalorder %s103, %s104
      %p118 = scmp.eq.s32.totalorder %s28, 1
      %p119 = por %p117, %p118
      %p121 = scmp.ne.s32.totalorder %s104, %s120
      %p122 = scmp.eq.s32.totalorder %s28, 0
      %p123 = por %p121, %p122
      %s125 = sadd.s32 %s124, 1
      %p128 = scmp.eq.s32.totalorder %s22, 1
      %p129 = scmp.ne.s32.totalorder %s124, %s126
      %p130 = scmp.eq.s32.totalorder %s22, 0
      %p131 = por %p129, %p130
      %p132 = scmp.ne.s32.totalorder %s124, %s126
      %p133 = scmp.eq.s32.totalorder %s27, 1
      %p134 = por %p132, %p133
      %p135 = scmp.ne.s32.totalorder %s126, %s127
      %p136 = scmp.eq.s32.totalorder %s27, 0
      %p137 = por %p135, %p136
      %p138 = scmp.ne.s32.totalorder %s126, %s127
      %p139 = scmp.eq.s32.totalorder %s28, 1
      %p140 = por %p138, %p139
      %p142 = scmp.ne.s32.totalorder %s127, %s141
      %p143 = scmp.eq.s32.totalorder %s28, 0
      %p144 = por %p142, %p143
      %s146 = sadd.s32 %s145, 1
      %p149 = scmp.eq.s32.totalorder %s22, 1
      %p150 = scmp.ne.s32.totalorder %s145, %s147
      %p151 = scmp.eq.s32.totalorder %s22, 0
      %p152 = por %p150, %p151
      %p153 = scmp.ne.s32.totalorder %s145, %s147
      %p154 = scmp.eq.s32.totalorder %s27, 1
      %p155 = por %p153, %p154
      %p156 = scmp.ne.s32.totalorder %s147, %s148
      %p157 = scmp.eq.s32.totalorder %s27, 0
      %p158 = por %p156, %p157
      %p159 = scmp.ne.s32.totalorder %s147, %s148
      %p160 = scmp.eq.s32.totalorder %s28, 1
      %p161 = por %p159, %p160
      %p163 = scmp.ne.s32.totalorder %s148, %s162
      %p164 = scmp.eq.s32.totalorder %s28, 0
      %p165 = por %p163, %p164
      %s167 = sadd.s32 %s166, 1
      %p170 = scmp.eq.s32.totalorder %s22, 1
      %p171 = scmp.ne.s32.totalorder %s166, %s168
      %p172 = scmp.eq.s32.totalorder %s22, 0
      %p173 = por %p171, %p172
      %p174 = scmp.ne.s32.totalorder %s166, %s168
      %p175 = scmp.eq.s32.totalorder %s27, 1
      %p176 = por %p174, %p175
      %p177 = scmp.ne.s32.totalorder %s168, %s169
      %p178 = scmp.eq.s32.totalorder %s27, 0
      %p179 = por %p177, %p178
      %p180 = scmp.ne.s32.totalorder %s168, %s169
      %p181 = scmp.eq.s32.totalorder %s28, 1
      %p182 = por %p180, %p181
      %p184 = scmp.ne.s32.totalorder %s169, %s183
      %p185 = scmp.eq.s32.totalorder %s28, 0
      %p186 = por %p184, %p185
      %s187 = ssub.s32 %s29, %s41
      %p188 = scmp.eq.s32.totalorder %s187, 0
      %s190 = sadd.s32 %s189, 1
      %s191 = scalar_select %p188, %s189, %s190
      %p194 = pneg %p188
      %p195 = scmp.eq.s32.totalorder %s22, 1
      %p196 = por %p194, %p195
      %p197 = scmp.ne.s32.totalorder %s189, %s192
      %p198 = scmp.eq.s32.totalorder %s22, 0
      %p199 = por %p197, %p198
      %p200 = scmp.ne.s32.totalorder %s189, %s192
      %p201 = scmp.eq.s32.totalorder %s27, 1
      %p202 = por %p200, %p201
      %p203 = scmp.ne.s32.totalorder %s192, %s193
      %p204 = scmp.eq.s32.totalorder %s27, 0
      %p205 = por %p203, %p204
      %p206 = scmp.ne.s32.totalorder %s192, %s193
      %p207 = scmp.eq.s32.totalorder %s28, 1
      %p208 = por %p206, %p207
      %p210 = scmp.ne.s32.totalorder %s193, %s209
      %p211 = scmp.eq.s32.totalorder %s28, 0
      %p212 = por %p210, %p211
      %p213 = scmp.le.s32.totalorder 1, %s22
      %p214 = scmp.lt.s32.totalorder %s22, 3
      %p215 = pnand %p213, %p214
      %p216 = pneg %p215
      // Predicated region
      $region9: #{tpu_custom_call.1} parent=5 // pred_check
        _
      $region10: #{tpu_custom_call.1} parent=5 // pred_check_branch
        %218 = sbr.rel (%p215) target = $region12
      $region11: #{tpu_custom_call.1} parent=5 // pred_region
        %s219 = ssub.s32 %s22, 1
        // Predicated region
        $region13: #{tpu_custom_call.1} parent=11 // pred_check
          %p220 = pneg %p137
        $region14: #{tpu_custom_call.1} parent=11 // pred_check_branch
          %222 = sbr.rel (%p220) target = $region16
        $region15: #{tpu_custom_call.1} parent=11 // pred_region
          %224 = vsyncadd [#allocation13], 0
          %s225 = sshll.u32 %s3, 4
          %s226 = int_to_ptr.hbm [resolvable:$true] %s225
          %s227 = sshll.u32 [#allocation12], 4
          %s228 = int_to_ptr.vmem [resolvable:$true] %s227
          %233 = dma.hbm_to_vmem [thread:$0]  %s226, 256, %s228, [#allocation13], 64, 64, 4
        $region16: #{tpu_custom_call.1} parent=11 // pred_fallthru
          _
        // Predicated region
        $region17: #{tpu_custom_call.1} parent=11 // pred_check
          %p234 = pneg %p158
        $region18: #{tpu_custom_call.1} parent=11 // pred_check_branch
          %236 = sbr.rel (%p234) target = $region20
        $region19: #{tpu_custom_call.1} parent=11 // pred_region
          %238 = vsyncadd [#allocation13], 0
          %s239 = sshll.u32 %s4, 4
          %s240 = int_to_ptr.hbm [resolvable:$true] %s239
          %s241 = sshll.u32 [#allocation14], 4
          %s242 = int_to_ptr.vmem [resolvable:$true] %s241
          %247 = dma.hbm_to_vmem [thread:$0]  %s240, 256, %s242, [#allocation13], 64, 64, 4
        $region20: #{tpu_custom_call.1} parent=11 // pred_fallthru
          _
        // Predicated region
        $region21: #{tpu_custom_call.1} parent=11 // pred_check
          %p248 = pneg %p179
        $region22: #{tpu_custom_call.1} parent=11 // pred_check_branch
          %250 = sbr.rel (%p248) target = $region24
        $region23: #{tpu_custom_call.1} parent=11 // pred_region
          _
        $region24: #{tpu_custom_call.1} parent=11 // pred_fallthru
          _
      $region12: #{tpu_custom_call.1} parent=5 // pred_fallthru
        _
      %p251 = scmp.lt.s32.totalorder %s22, 2
      // Predicated region
      $region25: #{tpu_custom_call.1} parent=5 // pred_check
        %p252 = pneg %p251
      $region26: #{tpu_custom_call.1} parent=5 // pred_check_branch
        %254 = sbr.rel (%p252) target = $region28
      $region27: #{tpu_custom_call.1} parent=5 // pred_region
        // Predicated region
        $region29: #{tpu_custom_call.1} parent=27 // pred_check
          %p255 = pneg %p54
        $region30: #{tpu_custom_call.1} parent=27 // pred_check_branch
          %257 = sbr.rel (%p255) target = $region32
        $region31: #{tpu_custom_call.1} parent=27 // pred_region
          %s258 = sand.u32 %s44, 1
          %s259 = scalar_lea.sflag [#allocation7], %s258
          %s260 = sand.u32 %s44, 1
          %s261 = smul.addr %s260, 2
          %s262 = scalar_lea.vmem [#allocation6], %s261
          %264 = vsyncadd %s259, 0
          %s265 = smul.addr %s29, 2
          %s266 = scalar_lea.hbm %s0, %s265
          %s268 = sshll.u32 %s266, 4
          %s269 = int_to_ptr.hbm [resolvable:$true] %s268
          %s270 = sshll.u32 %s262, 4
          %s271 = int_to_ptr.vmem [resolvable:$true] %s270
          %273 = dma.hbm_to_vmem [thread:$0]  %s269, 32, %s271, %s259
        $region32: #{tpu_custom_call.1} parent=27 // pred_fallthru
          _
        // Predicated region
        $region33: #{tpu_custom_call.1} parent=27 // pred_check
          %p274 = pneg %p82
        $region34: #{tpu_custom_call.1} parent=27 // pred_check_branch
          %276 = sbr.rel (%p274) target = $region36
        $region35: #{tpu_custom_call.1} parent=27 // pred_region
          %s277 = sand.u32 %s22, 1
          %s278 = scalar_lea.sflag [#allocation10], %s277
          %s279 = sand.u32 %s72, 1
          %s280 = smul.addr %s279, 8
          %s281 = scalar_lea.vmem [#allocation9], %s280
          %s282 = smul.u32 2, %s30
          %284 = vsyncadd %s278, 0
          %s285 = smul.addr %s29, 2
          %s286 = sadd.s32 %s282, %s285
          %s287 = smul.addr %s286, 4
          %s288 = scalar_lea.hbm %s1, %s287
          %s289 = sshll.u32 %s288, 4
          %s290 = int_to_ptr.hbm [resolvable:$true] %s289
          %s291 = sshll.u32 %s281, 4
          %s292 = int_to_ptr.vmem [resolvable:$true] %s291
          %297 = dma.hbm_to_vmem [thread:$0]  %s290, 128, %s292, %s278, 64, 64, 4
        $region36: #{tpu_custom_call.1} parent=27 // pred_fallthru
          _
        // Predicated region
        $region37: #{tpu_custom_call.1} parent=27 // pred_check
          %p298 = pneg %p110
        $region38: #{tpu_custom_call.1} parent=27 // pred_check_branch
          %300 = sbr.rel (%p298) target = $region40
        $region39: #{tpu_custom_call.1} parent=27 // pred_region
          %s301 = sand.u32 %s22, 1
          %s302 = scalar_lea.sflag [#allocation10], %s301
          %s303 = sand.u32 %s100, 1
          %s304 = scalar_lea.vmem [#allocation11], %s303
          %306 = vsyncadd %s302, 0
          %s307 = sadd.s32 %s30, %s29
          %s308 = scalar_lea.hbm %s2, %s307
          %s310 = sshll.u32 %s308, 4
          %s311 = int_to_ptr.hbm [resolvable:$true] %s310
          %s312 = sshll.u32 %s304, 4
          %s313 = int_to_ptr.vmem [resolvable:$true] %s312
          %315 = dma.hbm_to_vmem [thread:$0]  %s311, 16, %s313, %s302
        $region40: #{tpu_custom_call.1} parent=27 // pred_fallthru
          _
      $region28: #{tpu_custom_call.1} parent=5 // pred_fallthru
        _
      %p316 = scmp.le.s32.totalorder 1, %s22
      %p317 = scmp.lt.s32.totalorder %s22, 3
      %p318 = pnand %p316, %p317
      %p319 = pneg %p318
      // Predicated region
      $region41: #{tpu_custom_call.1} parent=5 // pred_check
        _
      $region42: #{tpu_custom_call.1} parent=5 // pred_check_branch
        %321 = sbr.rel (%p318) target = $region44
      $region43: #{tpu_custom_call.1} parent=5 // pred_region
        %s322 = ssub.s32 %s22, 1
        %s323 = sand.u32 %s47, 1
        %s324 = scalar_lea.sflag [#allocation7], %s323
        %s325 = sand.u32 %s47, 1
        %s326 = smul.addr %s325, 2
        %s327 = scalar_lea.vmem [#allocation6], %s326
        // Predicated region
        $region45: #{tpu_custom_call.1} parent=43 // pred_check
          %p328 = pneg %p60
        $region46: #{tpu_custom_call.1} parent=43 // pred_check_branch
          %330 = sbr.rel (%p328) target = $region48
        $region47: #{tpu_custom_call.1} parent=43 // pred_region
          %332 = dma.done %s324, 32
        $region48: #{tpu_custom_call.1} parent=43 // pred_fallthru
          _
        %s333 = sand.u32 %s27, 1
        %s334 = scalar_lea.sflag [#allocation10], %s333
        %s335 = sand.u32 %s75, 1
        %s336 = smul.addr %s335, 8
        %s337 = scalar_lea.vmem [#allocation9], %s336
        // Predicated region
        $region49: #{tpu_custom_call.1} parent=43 // pred_check
          %p338 = pneg %p88
        $region50: #{tpu_custom_call.1} parent=43 // pred_check_branch
          %340 = sbr.rel (%p338) target = $region52
        $region51: #{tpu_custom_call.1} parent=43 // pred_region
          %342 = dma.done %s334, 128
        $region52: #{tpu_custom_call.1} parent=43 // pred_fallthru
          _
        %s343 = sand.u32 %s27, 1
        %s344 = scalar_lea.sflag [#allocation10], %s343
        %s345 = sand.u32 %s103, 1
        %s346 = scalar_lea.vmem [#allocation11], %s345
        // Predicated region
        $region53: #{tpu_custom_call.1} parent=43 // pred_check
          %p347 = pneg %p116
        $region54: #{tpu_custom_call.1} parent=43 // pred_check_branch
          %349 = sbr.rel (%p347) target = $region56
        $region55: #{tpu_custom_call.1} parent=43 // pred_region
          %351 = dma.done %s344, 16
        $region56: #{tpu_custom_call.1} parent=43 // pred_fallthru
          _
        // Predicated region
        $region57: #{tpu_custom_call.1} parent=43 // pred_check
          %p352 = pneg %p137
        $region58: #{tpu_custom_call.1} parent=43 // pred_check_branch
          %354 = sbr.rel (%p352) target = $region60
        $region59: #{tpu_custom_call.1} parent=43 // pred_region
          %356 = dma.done [#allocation13], 256
        $region60: #{tpu_custom_call.1} parent=43 // pred_fallthru
          _
        // Predicated region
        $region61: #{tpu_custom_call.1} parent=43 // pred_check
          %p357 = pneg %p158
        $region62: #{tpu_custom_call.1} parent=43 // pred_check_branch
          %359 = sbr.rel (%p357) target = $region64
        $region63: #{tpu_custom_call.1} parent=43 // pred_region
          %361 = dma.done [#allocation13], 256
        $region64: #{tpu_custom_call.1} parent=43 // pred_fallthru
          _
        %s362 = sand.u32 %s47, 1
        %s363 = scalar_lea.sflag [#allocation7], %s362
        %s364 = sand.u32 %s47, 1
        %s365 = smul.addr %s364, 2
        %s366 = scalar_lea.vmem [#allocation6], %s365
        %p367 = pneg %p60
        %p368 = pneg %p57
        %s369 = sand.u32 %s27, 1
        %s370 = scalar_lea.sflag [#allocation10], %s369
        %s371 = sand.u32 %s75, 1
        %s372 = smul.addr %s371, 8
        %s373 = scalar_lea.vmem [#allocation9], %s372
        %p374 = pneg %p88
        %p375 = pneg %p85
        %s376 = sand.u32 %s27, 1
        %s377 = scalar_lea.sflag [#allocation10], %s376
        %s378 = sand.u32 %s103, 1
        %s379 = scalar_lea.vmem [#allocation11], %s378
        %p380 = pneg %p116
        %p381 = pneg %p113
        %p382 = pneg %p137
        %p383 = pneg %p134
        %p384 = pneg %p158
        %p385 = pneg %p155
        %p386 = pneg %p179
        %p387 = pneg %p176
        %p388 = pneg %p205
        %p389 = pneg %p202
        %s390 = sand.u32 %s192, 1
        %s391 = scalar_lea.sflag [#allocation8], %s390
        %s392 = sand.u32 %s192, 1
        %s393 = smul.addr %s392, 4
        %s394 = scalar_lea.vmem [#allocation15], %s393
        %s395 = smul.u32 2, %s32
        %p397 = scmp.eq.s32.totalorder %s32, 0
        // Predicated region
        $region65: #{tpu_custom_call.1} parent=43 // pred_check
          %p398 = pneg %p397
        $region66: #{tpu_custom_call.1} parent=43 // pred_check_branch
          %400 = sbr.rel (%p398) target = $region68
        $region67: #{tpu_custom_call.1} parent=43 // pred_region
          %vm401 = vcmask 3072
          %402 = vst.msk [vmem:[#allocation4] sm:$0xf] %vm401, -1e+30
          %403 = vst.msk [vmem:[#allocation4 + $0x4] sm:$0xf] %vm401, -1e+30
          %404 = vst.msk [vmem:[#allocation4 + $0x8] sm:$0xf] %vm401, -1e+30
          %405 = vst.msk [vmem:[#allocation4 + $0xc] sm:$0xf] %vm401, -1e+30
          %406 = vst.msk [vmem:[#allocation5] sm:$0xf] %vm401, 0.0
          %407 = vst.msk [vmem:[#allocation5 + $0x4] sm:$0xf] %vm401, 0.0
          %408 = vst.msk [vmem:[#allocation5 + $0x8] sm:$0xf] %vm401, 0.0
          %409 = vst.msk [vmem:[#allocation5 + $0xc] sm:$0xf] %vm401, 0.0
          %vm410 = vcmask 257024
          %411 = vst.msk [vmem:[#allocation3] sm:$0xf] %vm410, 0.0
        $region68: #{tpu_custom_call.1} parent=43 // pred_fallthru
          _
        %v412 = vld [vmem:[%s337] sm:$0xf]
        %v413 = vld [vmem:[%s337 + $0x4] sm:$0xf]
        %v414 = vld [vmem:[#allocation12] sm:$0xf]
        %v415 = vld [vmem:[#allocation12 + $0x4] sm:$0xf]
        %v416 = vld [vmem:[#allocation12 + $0x8] sm:$0xf]
        %v417 = vld [vmem:[#allocation12 + $0xc] sm:$0xf]
        %v420 = vunpack.c.l.b16 %v412
        %v421 = vunpack.c.l.b16 %v413
        %v422 = vpack.c.b16 %v421, %v420
        %v427 = vunpack.c.l.b16 %v414
        %v428 = vunpack.c.l.b16 %v415
        %v429 = vunpack.c.l.b16 %v416
        %v430 = vunpack.c.l.b16 %v417
        %v431 = vpack.c.b16 %v428, %v427
        %v432 = vpack.c.b16 %v430, %v429
        %vm435 = vcmask 261120
        %v437 = vsel %vm435, %v422, 0
        %439 = vmatpush.bf16.msra.mxu0 0
        %440 = vmatpush.bf16.msra.mxu0 0
        %441 = vmatpush.bf16.msra.mxu0 0
        %442 = vmatpush.bf16.msra.mxu0 0
        %443 = vmatpush.bf16.msra.mxu0 0
        %444 = vmatpush.bf16.msra.mxu0 0
        %445 = vmatpush.bf16.msra.mxu0 %v432
        %446 = vmatpush.bf16.msra.mxu0 %v431
        %447 = vmatmul.bf16.gmra.mxu0 %v437
        %v448 = vpop.f32.mrf.mxu0
        %v449 = vadd.f32 0.0, %v448
        %v450 = vpop.f32.mrf.mxu0
        %v451 = vadd.f32 0.0, %v450
        %452 = vdwg.mxu0
        %v453 = vpack.c.bf16 %v449, %v449
        %v454 = vpack.c.bf16 %v451, %v451
        %vm455 = vcmask 519168
        %456 = vst.msk [vmem:[#allocation2] sm:$0xf] %vm455, %v453
        %457 = vst.msk [vmem:[#allocation2 + $0x4] sm:$0xf] %vm455, %v454
        %v458 = vld [vmem:[%s327] sm:$0x3]
        %v459 = vld [vmem:[#allocation2] sm:$0xf]
        %v460 = vld [vmem:[#allocation2 + $0x4] sm:$0xf]
        %v461 = vld [vmem:[%s346] sm:$0x1]
        %vm462 = vcmp.eq.f32.partialorder %v461, 0.0
        %v463 = vsel %vm462, -1e+30, 0.0
        %v464 = vld [vmem:[#allocation3] sm:$0xf]
        %v466 = vperm.slane %v463, 0
        %v470 = vunpack.c.l.b16 %v459
        %v471 = vunpack.c.l.b16 %v460
        %v472 = vpack.c.b16 %v471, %v470
        %vm473 = vcmask 64512
        %v475 = vsel %vm473, %v458, 0
        %v478 = vsel %vm473, %v472, 0
        %480 = vmatpush.bf16.xpose.msra.mxu0 0
        %481 = vmatpush.bf16.xpose.msra.mxu0 0
        %482 = vmatpush.bf16.xpose.msra.mxu0 0
        %483 = vmatpush.bf16.xpose.msra.mxu0 0
        %484 = vmatpush.bf16.xpose.msra.mxu0 0
        %485 = vmatpush.bf16.xpose.msra.mxu0 0
        %486 = vmatpush.bf16.xpose.msra.mxu0 0
        %487 = vmatpush.bf16.xpose.msra.mxu0 %v478
        %488 = vmatmul.bf16.gmra.mxu0 %v475
        %v489 = vpop.f32.mrf.mxu0
        %v490 = vadd.f32 %v466, %v489
        %v491 = vpop.f32.mrf.mxu0
        %492 = vdwg.mxu0
        %v493 = vld [vmem:[#allocation4] sm:$0xf]
        %vm494 = vcmask 125952
        %v495 = vsel %vm494, %v490, -inf
        %496 = vmax.xlane.f32.xlu0 %v495
        %v497 = vpop.xlane.xlu0 %496
        %v498 = vmax.f32 %v493, %v497
        %v499 = vsub.f32 %v493, %v498
        %v500 = vmul.f32 %v499, 1.442695
        %v501 = vpow.pop %v500
        %503 = vset.pattern.permute.xlu0 0
        %504 = vperm.xlu0 %503, %v498
        %v505 = vpop.permute.xlu0 %504
        %v507 = vsub.f32 %v490, %v505
        %v508 = vmul.f32 %v507, 1.442695
        %v509 = vpow.pop %v508
        %v510 = vld [vmem:[#allocation5] sm:$0xf]
        %v511 = vmul.f32 %v501, %v510
        %v512 = vsel %vm494, %v509, 0.0
        %513 = vadd.xlane.f32.xlu0 %v512
        %v514 = vpop.xlane.xlu0 %513
        %v515 = vadd.f32 %v511, %v514
        %vm516 = vcmask 3072
        %517 = vst.msk [vmem:[#allocation5] sm:$0xf] %vm516, %v515
        %518 = vst.msk [vmem:[#allocation4] sm:$0xf] %vm516, %v498
        %v519 = vpack.c.bf16 %v509, %v509
        %520 = vrot.lane.b32.xlu0 %v472, 96
        %v521 = vpop.permute.xlu0 %520
        %vm523 = vcmask 130048
        %v525 = vsel %vm523, %v519, 0
        %527 = vmatpush.bf16.msra.mxu0 0
        %528 = vmatpush.bf16.msra.mxu0 0
        %529 = vmatpush.bf16.msra.mxu0 0
        %530 = vmatpush.bf16.msra.mxu0 0
        %531 = vmatpush.bf16.msra.mxu0 0
        %532 = vmatpush.bf16.msra.mxu0 0
        %533 = vmatpush.bf16.msra.mxu0 0
        %534 = vmatpush.bf16.msra.mxu0 %v521
        %535 = vmatmul.bf16.gmra.mxu0 %v525
        %v536 = vpop.f32.mrf.mxu0
        %v537 = vadd.f32 0.0, %v536
        %v538 = vpop.f32.mrf.mxu0
        %539 = vdwg.mxu0
        %541 = vset.pattern.permute.xlu0 0
        %542 = vperm.xlu0 %541, %v501
        %v543 = vpop.permute.xlu0 %542
        %545 = vst [vmem:[#allocation1] ss:$4 sm:$0xff] %v458
        %v546 = vld.sshfl [vmem:[#allocation1] sm:$0xff pattern:$0x73625140]
        %548 = vrot.lane.b32.xlu0 %v546, 120
        %v549 = vpop.permute.xlu0 %548
        %550 = vrot.lane.b32.xlu0 %v472, 120
        %v551 = vpop.permute.xlu0 %550
        %v553 = vsel %vm473, %v549, 0
        %v556 = vsel %vm473, %v551, 0
        %558 = vmatpush.bf16.xpose.msra.mxu0 0
        %559 = vmatpush.bf16.xpose.msra.mxu0 0
        %560 = vmatpush.bf16.xpose.msra.mxu0 0
        %561 = vmatpush.bf16.xpose.msra.mxu0 0
        %562 = vmatpush.bf16.xpose.msra.mxu0 0
        %563 = vmatpush.bf16.xpose.msra.mxu0 0
        %564 = vmatpush.bf16.xpose.msra.mxu0 0
        %565 = vmatpush.bf16.xpose.msra.mxu0 %v556
        %566 = vmatmul.bf16.gmra.mxu0 %v553
        %v567 = vpop.f32.mrf.mxu0
        %v568 = vadd.f32 %v466, %v567
        %v569 = vpop.f32.mrf.mxu0
        %570 = vdwg.mxu0
        %s571 = scalar_lea.vmem [#allocation4], 4
        %v572 = vld [vmem:[%s571] sm:$0xf]
        %v573 = vsel %vm494, %v568, -inf
        %574 = vmax.xlane.f32.xlu0 %v573
        %v575 = vpop.xlane.xlu0 %574
        %v576 = vmax.f32 %v572, %v575
        %v577 = vsub.f32 %v572, %v576
        %v578 = vmul.f32 %v577, 1.442695
        %v579 = vpow.pop %v578
        %581 = vset.pattern.permute.xlu0 0
        %582 = vperm.xlu0 %581, %v576
        %v583 = vpop.permute.xlu0 %582
        %v585 = vsub.f32 %v568, %v583
        %v586 = vmul.f32 %v585, 1.442695
        %v587 = vpow.pop %v586
        %s588 = scalar_lea.vmem [#allocation5], 4
        %v589 = vld [vmem:[%s588] sm:$0xf]
        %v590 = vmul.f32 %v579, %v589
        %v591 = vsel %vm494, %v587, 0.0
        %592 = vadd.xlane.f32.xlu0 %v591
        %v593 = vpop.xlane.xlu0 %592
        %v594 = vadd.f32 %v590, %v593
        %595 = vst.msk [vmem:[%s588] sm:$0xf] %vm516, %v594
        %596 = vst.msk [vmem:[%s571] sm:$0xf] %vm516, %v576
        %v597 = vpack.c.bf16 %v587, %v587
        %598 = vrot.lane.b32.xlu0 %v472, 88
        %v599 = vpop.permute.xlu0 %598
        %v602 = vsel %vm523, %v597, 0
        %604 = vmatpush.bf16.msra.mxu0 0
        %605 = vmatpush.bf16.msra.mxu0 0
        %606 = vmatpush.bf16.msra.mxu0 0
        %607 = vmatpush.bf16.msra.mxu0 0
        %608 = vmatpush.bf16.msra.mxu0 0
        %609 = vmatpush.bf16.msra.mxu0 0
        %610 = vmatpush.bf16.msra.mxu0 0
        %611 = vmatpush.bf16.msra.mxu0 %v599
        %612 = vmatmul.bf16.gmra.mxu0 %v602
        %v613 = vpop.f32.mrf.mxu0
        %v614 = vadd.f32 0.0, %v613
        %v615 = vpop.f32.mrf.mxu0
        %616 = vdwg.mxu0
        %618 = vset.pattern.permute.xlu0 0
        %619 = vperm.xlu0 %618, %v579
        %v620 = vpop.permute.xlu0 %619
        %622 = vst [vmem:[#allocation1] ss:$4 sm:$0xff] %v458
        %v623 = vld.sshfl [vmem:[#allocation1] sm:$0xff pattern:$0x73625140]
        %625 = vrot.lane.b32.xlu0 %v623, 112
        %v626 = vpop.permute.xlu0 %625
        %627 = vrot.lane.b32.xlu0 %v472, 112
        %v628 = vpop.permute.xlu0 %627
        %v630 = vsel %vm473, %v626, 0
        %v633 = vsel %vm473, %v628, 0
        %635 = vmatpush.bf16.xpose.msra.mxu0 0
        %636 = vmatpush.bf16.xpose.msra.mxu0 0
        %637 = vmatpush.bf16.xpose.msra.mxu0 0
        %638 = vmatpush.bf16.xpose.msra.mxu0 0
        %639 = vmatpush.bf16.xpose.msra.mxu0 0
        %640 = vmatpush.bf16.xpose.msra.mxu0 0
        %641 = vmatpush.bf16.xpose.msra.mxu0 0
        %642 = vmatpush.bf16.xpose.msra.mxu0 %v633
        %643 = vmatmul.bf16.gmra.mxu0 %v630
        %v644 = vpop.f32.mrf.mxu0
        %v645 = vadd.f32 %v466, %v644
        %v646 = vpop.f32.mrf.mxu0
        %647 = vdwg.mxu0
        %s648 = scalar_lea.vmem [#allocation4], 8
        %v649 = vld [vmem:[%s648] sm:$0xf]
        %v650 = vsel %vm494, %v645, -inf
        %651 = vmax.xlane.f32.xlu0 %v650
        %v652 = vpop.xlane.xlu0 %651
        %v653 = vmax.f32 %v649, %v652
        %v654 = vsub.f32 %v649, %v653
        %v655 = vmul.f32 %v654, 1.442695
        %v656 = vpow.pop %v655
        %658 = vset.pattern.permute.xlu0 0
        %659 = vperm.xlu0 %658, %v653
        %v660 = vpop.permute.xlu0 %659
        %v662 = vsub.f32 %v645, %v660
        %v663 = vmul.f32 %v662, 1.442695
        %v664 = vpow.pop %v663
        %s665 = scalar_lea.vmem [#allocation5], 8
        %v666 = vld [vmem:[%s665] sm:$0xf]
        %v667 = vmul.f32 %v656, %v666
        %v668 = vsel %vm494, %v664, 0.0
        %669 = vadd.xlane.f32.xlu0 %v668
        %v670 = vpop.xlane.xlu0 %669
        %v671 = vadd.f32 %v667, %v670
        %672 = vst.msk [vmem:[%s665] sm:$0xf] %vm516, %v671
        %673 = vst.msk [vmem:[%s648] sm:$0xf] %vm516, %v653
        %v674 = vpack.c.bf16 %v664, %v664
        %675 = vrot.lane.b32.xlu0 %v472, 80
        %v676 = vpop.permute.xlu0 %675
        %v679 = vsel %vm523, %v674, 0
        %681 = vmatpush.bf16.msra.mxu0 0
        %682 = vmatpush.bf16.msra.mxu0 0
        %683 = vmatpush.bf16.msra.mxu0 0
        %684 = vmatpush.bf16.msra.mxu0 0
        %685 = vmatpush.bf16.msra.mxu0 0
        %686 = vmatpush.bf16.msra.mxu0 0
        %687 = vmatpush.bf16.msra.mxu0 0
        %688 = vmatpush.bf16.msra.mxu0 %v676
        %689 = vmatmul.bf16.gmra.mxu0 %v679
        %v690 = vpop.f32.mrf.mxu0
        %v691 = vadd.f32 0.0, %v690
        %v692 = vpop.f32.mrf.mxu0
        %693 = vdwg.mxu0
        %695 = vset.pattern.permute.xlu0 0
        %696 = vperm.xlu0 %695, %v656
        %v697 = vpop.permute.xlu0 %696
        %699 = vst [vmem:[#allocation1] ss:$4 sm:$0xff] %v458
        %v700 = vld.sshfl [vmem:[#allocation1] sm:$0xff pattern:$0x73625140]
        %702 = vrot.lane.b32.xlu0 %v700, 104
        %v703 = vpop.permute.xlu0 %702
        %704 = vrot.lane.b32.xlu0 %v472, 104
        %v705 = vpop.permute.xlu0 %704
        %v707 = vsel %vm473, %v703, 0
        %v710 = vsel %vm473, %v705, 0
        %712 = vmatpush.bf16.xpose.msra.mxu0 0
        %713 = vmatpush.bf16.xpose.msra.mxu0 0
        %714 = vmatpush.bf16.xpose.msra.mxu0 0
        %715 = vmatpush.bf16.xpose.msra.mxu0 0
        %716 = vmatpush.bf16.xpose.msra.mxu0 0
        %717 = vmatpush.bf16.xpose.msra.mxu0 0
        %718 = vmatpush.bf16.xpose.msra.mxu0 0
        %719 = vmatpush.bf16.xpose.msra.mxu0 %v710
        %720 = vmatmul.bf16.gmra.mxu0 %v707
        %v721 = vpop.f32.mrf.mxu0
        %v722 = vadd.f32 %v466, %v721
        %v723 = vpop.f32.mrf.mxu0
        %724 = vdwg.mxu0
        %s725 = scalar_lea.vmem [#allocation4], 12
        %v726 = vld [vmem:[%s725] sm:$0xf]
        %v727 = vsel %vm494, %v722, -inf
        %728 = vmax.xlane.f32.xlu0 %v727
        %v729 = vpop.xlane.xlu0 %728
        %v730 = vmax.f32 %v726, %v729
        %v731 = vsub.f32 %v726, %v730
        %v732 = vmul.f32 %v731, 1.442695
        %v733 = vpow.pop %v732
        %735 = vset.pattern.permute.xlu0 0
        %736 = vperm.xlu0 %735, %v730
        %v737 = vpop.permute.xlu0 %736
        %v739 = vsub.f32 %v722, %v737
        %v740 = vmul.f32 %v739, 1.442695
        %v741 = vpow.pop %v740
        %s742 = scalar_lea.vmem [#allocation5], 12
        %v743 = vld [vmem:[%s742] sm:$0xf]
        %v744 = vmul.f32 %v733, %v743
        %v745 = vsel %vm494, %v741, 0.0
        %746 = vadd.xlane.f32.xlu0 %v745
        %v747 = vpop.xlane.xlu0 %746
        %v748 = vadd.f32 %v744, %v747
        %749 = vst.msk [vmem:[%s742] sm:$0xf] %vm516, %v748
        %750 = vst.msk [vmem:[%s725] sm:$0xf] %vm516, %v730
        %v751 = vpack.c.bf16 %v741, %v741
        %752 = vrot.lane.b32.xlu0 %v472, 72
        %v753 = vpop.permute.xlu0 %752
        %v756 = vsel %vm523, %v751, 0
        %758 = vmatpush.bf16.msra.mxu0 0
        %759 = vmatpush.bf16.msra.mxu0 0
        %760 = vmatpush.bf16.msra.mxu0 0
        %761 = vmatpush.bf16.msra.mxu0 0
        %762 = vmatpush.bf16.msra.mxu0 0
        %763 = vmatpush.bf16.msra.mxu0 0
        %764 = vmatpush.bf16.msra.mxu0 0
        %765 = vmatpush.bf16.msra.mxu0 %v753
        %766 = vmatmul.bf16.gmra.mxu0 %v756
        %v767 = vpop.f32.mrf.mxu0
        %v768 = vadd.f32 0.0, %v767
        %v769 = vpop.f32.mrf.mxu0
        %770 = vdwg.mxu0
        %772 = vset.pattern.permute.xlu0 0
        %773 = vperm.xlu0 %772, %v733
        %v774 = vpop.permute.xlu0 %773
        %v776 = vsel %vm473, %v543, %v620
        %v777 = vsel %vm523, %v776, %v697
        %vm778 = vcmask 195584
        %v779 = vsel %vm778, %v777, %v774
        %v780 = vmul.f32 %v779, %v464
        %782 = vrot.lane.b32.xlu0 %v614, 8
        %v783 = vpop.permute.xlu0 %782
        %786 = vrot.lane.b32.xlu0 %v691, 16
        %v787 = vpop.permute.xlu0 %786
        %790 = vrot.lane.b32.xlu0 %v768, 24
        %v791 = vpop.permute.xlu0 %790
        %v793 = vsel %vm473, %v537, %v783
        %v794 = vsel %vm523, %v793, %v787
        %v795 = vsel %vm778, %v794, %v791
        %v796 = vadd.f32 %v780, %v795
        %vm797 = vcmask 257024
        %798 = vst.msk [vmem:[#allocation3] sm:$0xf] %vm797, %v796
        // Predicated region
        $region69: #{tpu_custom_call.1} parent=43 // pred_check
          %p799 = pneg %p397
        $region70: #{tpu_custom_call.1} parent=43 // pred_check_branch
          %801 = sbr.rel (%p799) target = $region72
        $region71: #{tpu_custom_call.1} parent=43 // pred_region
          %v802 = vld [vmem:[#allocation3] sm:$0xf]
          %v803 = vld [vmem:[#allocation5] sm:$0xf]
          %v804 = vrcp.pop %v803
          %806 = vset.pattern.permute.xlu0 0
          %807 = vperm.xlu0 %806, %v804
          %v808 = vpop.permute.xlu0 %807
          %v810 = vmul.f32 %v802, %v808
          %v811 = vpack.c.bf16 %v810, %v810
          %v812 = vld [vmem:[%s588] sm:$0xf]
          %v813 = vrcp.pop %v812
          %815 = vset.pattern.permute.xlu0 0
          %816 = vperm.xlu0 %815, %v813
          %v817 = vpop.permute.xlu0 %816
          %v819 = vmul.f32 %v802, %v817
          %v820 = vpack.c.bf16 %v819, %v819
          %v821 = vld [vmem:[%s665] sm:$0xf]
          %v822 = vrcp.pop %v821
          %824 = vset.pattern.permute.xlu0 0
          %825 = vperm.xlu0 %824, %v822
          %v826 = vpop.permute.xlu0 %825
          %v828 = vmul.f32 %v802, %v826
          %v829 = vpack.c.bf16 %v828, %v828
          %v830 = vld [vmem:[%s742] sm:$0xf]
          %v831 = vrcp.pop %v830
          %833 = vset.pattern.permute.xlu0 0
          %834 = vperm.xlu0 %833, %v831
          %v835 = vpop.permute.xlu0 %834
          %v837 = vmul.f32 %v802, %v835
          %v838 = vpack.c.bf16 %v837, %v837
          %v841 = vsel %vm473, %v811, %v820
          %v843 = vsel %vm523, %v841, %v829
          %v845 = vsel %vm778, %v843, %v838
          %v846 = vld [vmem:[#allocation14] sm:$0xf]
          %v847 = vld [vmem:[#allocation14 + $0x4] sm:$0xf]
          %v848 = vld [vmem:[#allocation14 + $0x8] sm:$0xf]
          %v849 = vld [vmem:[#allocation14 + $0xc] sm:$0xf]
          %v850 = vld [vmem:[%s5] sm:$0x1]
          %v852 = vperm.slane %v850, 0
          %v858 = vunpack.c.l.b16 %v846
          %v859 = vunpack.c.l.b16 %v847
          %v860 = vunpack.c.l.b16 %v848
          %v861 = vunpack.c.l.b16 %v849
          %v862 = vpack.c.b16 %v859, %v858
          %v863 = vpack.c.b16 %v861, %v860
          %v866 = vsel %vm435, %v845, 0
          %868 = vmatpush.bf16.msra.mxu0 0
          %869 = vmatpush.bf16.msra.mxu0 0
          %870 = vmatpush.bf16.msra.mxu0 0
          %871 = vmatpush.bf16.msra.mxu0 0
          %872 = vmatpush.bf16.msra.mxu0 0
          %873 = vmatpush.bf16.msra.mxu0 0
          %874 = vmatpush.bf16.msra.mxu0 %v863
          %875 = vmatpush.bf16.msra.mxu0 %v862
          %876 = vmatmul.bf16.gmra.mxu0 %v866
          %v877 = vpop.f32.mrf.mxu0
          %v878 = vadd.f32 %v852, %v877
          %v879 = vpop.f32.mrf.mxu0
          %880 = vdwg.mxu0
          %881 = vst.msk [vmem:[%s394] sm:$0xf] %vm797, %v878
        $region72: #{tpu_custom_call.1} parent=43 // pred_fallthru
          _
        %s882 = sand.u32 %s192, 1
        %s883 = scalar_lea.sflag [#allocation8], %s882
        %s884 = sand.u32 %s192, 1
        %s885 = smul.addr %s884, 4
        %s886 = scalar_lea.vmem [#allocation15], %s885
        // Predicated region
        $region73: #{tpu_custom_call.1} parent=43 // pred_check
          %p887 = pneg %p202
        $region74: #{tpu_custom_call.1} parent=43 // pred_check_branch
          %889 = sbr.rel (%p887) target = $region76
        $region75: #{tpu_custom_call.1} parent=43 // pred_region
          %891 = vsyncadd %s883, 0
          %s892 = smul.addr %s31, 4
          %s893 = scalar_lea.hbm %s6, %s892
          %s895 = sshll.u32 %s886, 4
          %s896 = int_to_ptr.vmem [resolvable:$true] %s895
          %s897 = sshll.u32 %s893, 4
          %s898 = int_to_ptr.hbm [resolvable:$true] %s897
          %900 = dma.vmem_to_hbm [thread:$0]  %s896, 64, %s898, %s883
        $region76: #{tpu_custom_call.1} parent=43 // pred_fallthru
          _
      $region44: #{tpu_custom_call.1} parent=5 // pred_fallthru
        _
      %p901 = scmp.le.s32.totalorder 2, %s22
      // Predicated region
      $region77: #{tpu_custom_call.1} parent=5 // pred_check
        %p902 = pneg %p901
      $region78: #{tpu_custom_call.1} parent=5 // pred_check_branch
        %904 = sbr.rel (%p902) target = $region80
      $region79: #{tpu_custom_call.1} parent=5 // pred_region
        %s905 = ssub.s32 %s22, 2
        // Predicated region
        $region81: #{tpu_custom_call.1} parent=79 // pred_check
          %p906 = pneg %p208
        $region82: #{tpu_custom_call.1} parent=79 // pred_check_branch
          %908 = sbr.rel (%p906) target = $region84
        $region83: #{tpu_custom_call.1} parent=79 // pred_region
          %s909 = sand.u32 %s193, 1
          %s910 = scalar_lea.sflag [#allocation8], %s909
          %s911 = sand.u32 %s193, 1
          %s912 = smul.addr %s911, 4
          %s913 = scalar_lea.vmem [#allocation15], %s912
          %915 = dma.done %s910, 64
        $region84: #{tpu_custom_call.1} parent=79 // pred_fallthru
          _
      $region80: #{tpu_custom_call.1} parent=5 // pred_fallthru
        _
    $region6: #{tpu_custom_call.1} parent=1 // loop_footer
      %s26 = sadd.s32 1, %s22
    $region7: #{tpu_custom_call.1} parent=1 // loop_footer_branch
      %21 = sbr.rel target = $region3
    $region8: #{tpu_custom_call.1} parent=1 // loop_exit
      _
    %916 = vsyncpa [#allocation7], 1
    %s917 = scalar_lea.sflag [#allocation7], 1
    %918 = vsyncpa %s917, 1
    %919 = vsyncpa [#allocation10], 1
    %s920 = scalar_lea.sflag [#allocation10], 1
    %921 = vsyncpa %s920, 1
    %922 = vsyncpa [#allocation13], 1
    %923 = vsyncpa [#allocation8], 1
    %s924 = scalar_lea.sflag [#allocation8], 1
    %925 = vsyncpa %s924, 1

</llo_original>
